<compile_context>
chip_gen: v7x
topology: tpu7x:2x2x1
jax: 0.10.0
libtpu: 0.0.40
codegen_flags: <defaults>
</compile_context>

<pallas_src>
import jax
import jax.numpy as jnp
from jax import lax
from jax.experimental import pallas as pl
from jax.experimental.pallas import tpu as pltpu


def _sigmoid(x):
    # exact identity sigmoid(x) == 0.5 * tanh(x/2) + 0.5 ; one EUP push, no divide
    return 0.5 * jnp.tanh(0.5 * x) + 0.5


def _layer_norm(x, gamma, beta, eps=1e-5):
    mu = jnp.mean(x, axis=-1, keepdims=True)
    var = jnp.mean(jnp.square(x - mu), axis=-1, keepdims=True)
    return (x - mu) * lax.rsqrt(var + eps) * gamma + beta


def critic_kernel(state_ref, action_ref,
                  w_ih_ref, w_hh_ref, b_lstm_ref,
                  w1h_ref, w1a_ref, w2_ref, vec_ref,
                  out_ref,
                  xp_scr):
    BT = out_ref.shape[0]            # batch tile (sublane multiple)
    H = w_hh_ref.shape[0]            # hidden size (gates packed: width 4*H)
    T = state_ref.shape[1] // BT     # sequence length

    # ---- input projection for ALL T steps: one bf16 MXU matmul (f32 accumulate)
    # hoisted off the serial recurrence path, parked in VMEM scratch.
    xp_scr[...] = (jnp.dot(state_ref[0], w_ih_ref[...],
                           preferred_element_type=jnp.float32)
                   + b_lstm_ref[...])

    # ---- LSTM recurrence: h/c live in registers (f32); only h @ W_hh per step.
    def step(t, carry):
        h, c = carry                                       # (BT, H) f32
        row = pl.multiple_of(t * BT, BT)                   # sublane-aligned start
        gates = (jnp.dot(h.astype(jnp.bfloat16), w_hh_ref[...],
                         preferred_element_type=jnp.float32)
                 + xp_scr[pl.ds(row, BT), :])              # (BT, 4H) f32
        # PyTorch gate order [i|f|g|o] packed in one lane group: one sigmoid
        # push + one tanh push on the full vreg, then 32-lane sub-blocks.
        sig = _sigmoid(gates)
        tnh = jnp.tanh(gates)
        i = sig[:, 0 * H:1 * H]
        f = sig[:, 1 * H:2 * H]
        g = tnh[:, 2 * H:3 * H]
        o = sig[:, 3 * H:4 * H]
        c = f * c + i * g
        h = o * jnp.tanh(c)
        return h, c

    h0 = jnp.zeros((BT, H), jnp.float32)
    c0 = jnp.zeros((BT, H), jnp.float32)
    h_last, _ = lax.fori_loop(0, T, step, (h0, c0), unroll=min(T, 8))

    # ---- MLP head (runs once, f32). concat([h, action]) @ W1 as a split matmul.
    vec = vec_ref[...]                                     # (8, H) packed vectors
    b1, g1, be1 = vec[0:1, :], vec[1:2, :], vec[2:3, :]
    b2, g2, be2 = vec[3:4, :], vec[4:5, :], vec[5:6, :]
    w3, b3 = vec[6:7, :], vec[7:8, 0:1]

    z1 = (jnp.dot(h_last, w1h_ref[...], preferred_element_type=jnp.float32)
          + jnp.dot(action_ref[...], w1a_ref[...],
                    preferred_element_type=jnp.float32)
          + b1)
    x1 = jnp.maximum(_layer_norm(z1, g1, be1), 0.0)

    z2 = jnp.dot(x1, w2_ref[...], preferred_element_type=jnp.float32) + b2
    x2 = jnp.maximum(_layer_norm(z2, g2, be2), 0.0)

    # layer3 (H -> 1): VPU multiply + lane reduction, keeps the MXU out of it.
    q = jnp.sum(x2 * w3, axis=-1, keepdims=True) + b3
    out_ref[...] = q.astype(out_ref.dtype)


# ------------------------- wrapper / layout plumbing -------------------------

def _pad_to(x, axis, size):
    pad = size - x.shape[axis]
    if pad <= 0:
        return x
    cfg = [(0, 0)] * x.ndim
    cfg[axis] = (0, pad)
    return jnp.pad(x, cfg)


def critic_pallas(state, action, p):
    """state: (B, T, S) batch-first (like PyTorch); action: (B, A) -> (B, 1)."""
    B, T, S = state.shape
    H = p["w_hh"].shape[0]
    BT = 8                          # batch tile = sublane multiple
    Bp = -(-B // BT) * BT
    G = Bp // BT                    # batch-tile grid (shards across v7x's 2 TCs)

    # --- one-time layout plumbing in the XLA wrapper (free, off the kernel) ---
    # pad batch, group into tiles of BT, time-major inside each tile, flatten
    # (T, BT) -> rows so the kernel never reshapes inside VMEM.
    st = _pad_to(state, 0, Bp)                              # (Bp, T, S)
    st = st.reshape(G, BT, T, S).transpose(0, 2, 1, 3)      # (G, T, BT, S)
    st = st.reshape(G, T * BT, S).astype(jnp.bfloat16)      # bf16 matmul operand
    act = _pad_to(action, 0, Bp)                            # (Bp, A)

    w_ih = p["w_ih"].astype(jnp.bfloat16)                   # (S,  4H) bf16
    w_hh = p["w_hh"].astype(jnp.bfloat16)                   # (H,  4H) bf16
    b_lstm = p["b_lstm"]                                    # (1,  4H) f32
    w1h = p["w1"][:H]                                       # (H,  H)
    w1a = p["w1"][H:]                                       # (A,  H)
    # pack the eight small per-layer vectors into one (8, H) slab -> one DMA
    vec_slab = jnp.concatenate(
        [p["b1"], p["g1"], p["be1"], p["b2"], p["g2"], p["be2"],
         p["w3"].T, jnp.broadcast_to(p["b3"], (1, H))], axis=0)   # (8, H)

    inputs = (st, act, w_ih, w_hh, b_lstm, w1h, w1a, p["w2"], vec_slab)

    def _full_spec(arr):
        n = arr.ndim
        return pl.BlockSpec(arr.shape, lambda g, _n=n: (0,) * _n)

    grid_spec = pltpu.PrefetchScalarGridSpec(
        num_scalar_prefetch=0,
        grid=(G,),
        in_specs=[
            pl.BlockSpec((1, T * BT, S), lambda g: (g, 0, 0)),   # state tile
            pl.BlockSpec((BT, act.shape[1]), lambda g: (g, 0)),  # action tile
            _full_spec(w_ih), _full_spec(w_hh), _full_spec(b_lstm),
            _full_spec(w1h), _full_spec(w1a), _full_spec(p["w2"]),
            _full_spec(vec_slab),
        ],
        out_specs=pl.BlockSpec((BT, 1), lambda g: (g, 0)),
        # hoisted x-projection scratch; for large T chunk this over T / use bf16
        scratch_shapes=[pltpu.VMEM((T * BT, 4 * H), jnp.float32)],
    )

    out = pl.pallas_call(
        critic_kernel,
        out_shape=jax.ShapeDtypeStruct((Bp, 1), jnp.float32),
        grid_spec=grid_spec,
        compiler_params=pltpu.CompilerParams(
            dimension_semantics=("parallel",),
            vmem_limit_bytes=32 * 1024 * 1024),
    )(*inputs)
    return out[:B]


# ----------------------------- params & reference ----------------------------

def init_params(key, state_dim, action_dim, hidden_dim):
    """Deterministic synthetic parameters; shapes match nn.LSTM / nn.Linear /
    nn.LayerNorm of the PyTorch module (weights stored pre-transposed)."""
    H, S, A = hidden_dim, state_dim, action_dim
    ks = jax.random.split(key, 8)

    def u(k, shape, fan_in):
        s = 1.0 / (fan_in ** 0.5)
        return jax.random.uniform(k, shape, jnp.float32, -s, s)

    p = {}
    # LSTM (PyTorch weight_ih_l0: (4H, S) -> stored as (S, 4H); gate order i,f,g,o).
    # The kernel keeps these weights in bf16, so the canonical values are made
    # bf16-representable; the f32 reference then evaluates the exact same network.
    p["w_ih"] = u(ks[0], (S, 4 * H), H).astype(jnp.bfloat16).astype(jnp.float32)
    p["w_hh"] = u(ks[1], (H, 4 * H), H).astype(jnp.bfloat16).astype(jnp.float32)
    b_ih = u(ks[2], (1, 4 * H), H)
    b_hh = u(ks[3], (1, 4 * H), H)
    p["b_lstm"] = b_ih + b_hh
    # layer1: Linear(H + A -> H) + LayerNorm(H)
    p["w1"] = u(ks[4], (H + A, H), H + A)
    p["b1"] = u(ks[5], (1, H), H + A)
    p["g1"] = jnp.ones((1, H), jnp.float32)
    p["be1"] = jnp.zeros((1, H), jnp.float32)
    # layer2: Linear(H -> H) + LayerNorm(H)
    p["w2"] = u(ks[6], (H, H), H)
    p["b2"] = u(ks[7], (1, H), H)
    p["g2"] = jnp.ones((1, H), jnp.float32)
    p["be2"] = jnp.zeros((1, H), jnp.float32)
    # layer3: Linear(H -> 1)
    k8, k9 = jax.random.split(ks[0])
    p["w3"] = u(k8, (H, 1), H)
    p["b3"] = u(k9, (1, 1), H)
    return p


def critic_reference(state, action, p):
    """Pure-JAX f32 reference of the PyTorch forward (batch-first state)."""
    H = p["w_hh"].shape[0]
    B, T, S = state.shape

    def cell(carry, x_t):
        h, c = carry
        gates = x_t @ p["w_ih"] + h @ p["w_hh"] + p["b_lstm"]
        i = jax.nn.sigmoid(gates[:, :H])
        f = jax.nn.sigmoid(gates[:, H:2 * H])
        g = jnp.tanh(gates[:, 2 * H:3 * H])
        o = jax.nn.sigmoid(gates[:, 3 * H:])
        c = f * c + i * g
        h = o * jnp.tanh(c)
        return (h, c), None

    h0 = jnp.zeros((B, H), jnp.float32)
    c0 = jnp.zeros((B, H), jnp.float32)
    (h, _), _ = lax.scan(cell, (h0, c0), jnp.transpose(state, (1, 0, 2)))

    def ln(x, g, b, eps=1e-5):
        mu = x.mean(-1, keepdims=True)
        var = ((x - mu) ** 2).mean(-1, keepdims=True)
        return (x - mu) / jnp.sqrt(var + eps) * g + b

    sa = jnp.concatenate([h, action], -1)
    x = jax.nn.relu(ln(sa @ p["w1"] + p["b1"], p["g1"], p["be1"]))
    x = jax.nn.relu(ln(x @ p["w2"] + p["b2"], p["g2"], p["be2"]))
    return x @ p["w3"] + p["b3"]


if __name__ == "__main__":
    B, T, S, A, H = 2, 8, 4, 4, 32
    key = jax.random.PRNGKey(0)
    k_state, k_action, k_param = jax.random.split(key, 3)

    state = jax.random.normal(k_state, (B, T, S), jnp.float32)   # batch-first
    action = jax.random.normal(k_action, (B, A), jnp.float32)
    params = init_params(k_param, S, A, H)

    q = critic_pallas(state, action, params)
    q = jax.block_until_ready(q)

    q_ref = critic_reference(state, action, params)
    assert q.shape == (B, 1), q.shape
    # Weights are bf16-representable (exact in the kernel); the remaining
    # kernel-vs-f32-reference difference comes from the bf16 casts of the
    # state / recurrent h matmul operands, which bounds the error well below
    # this tolerance at these sizes.
    assert jnp.allclose(q, q_ref, rtol=2e-2, atol=2e-2), (q, q_ref)
    print("KERNEL_OK")
</pallas_src>

<mosaic_0001>
module attributes {stable_mosaic.version = 11 : i64} {
  func.func @critic_kernel(%arg0: i32, %arg1: memref<1x64x4xbf16, #tpu.memory_space<vmem>>, %arg2: memref<8x4xf32, #tpu.memory_space<vmem>>, %arg3: memref<4x128xbf16, #tpu.memory_space<vmem>>, %arg4: memref<32x128xbf16, #tpu.memory_space<vmem>>, %arg5: memref<1x128xf32, #tpu.memory_space<vmem>>, %arg6: memref<32x32xf32, #tpu.memory_space<vmem>>, %arg7: memref<4x32xf32, #tpu.memory_space<vmem>>, %arg8: memref<32x32xf32, #tpu.memory_space<vmem>>, %arg9: memref<8x32xf32, #tpu.memory_space<vmem>>, %arg10: memref<8x1xf32, #tpu.memory_space<vmem>>, %arg11: memref<64x128xf32, #tpu.memory_space<vmem>>) attributes {dimension_semantics = [#tpu.dimension_semantics<parallel>], iteration_bounds = array<i64: 1>, scalar_prefetch = 0 : i64, scratch_operands = 1 : i64, tpu.core_type = #tpu.core_type<tc>, window_params = [{transform_indices = @transform_0, window_bounds = array<i64: 1, 64, 4>}, {transform_indices = @transform_1, window_bounds = array<i64: 8, 4>}, {pipeline_mode = #tpu.pipeline_mode<synchronous>, transform_indices = @transform_2, window_bounds = array<i64: 4, 128>}, {pipeline_mode = #tpu.pipeline_mode<synchronous>, transform_indices = @transform_3, window_bounds = array<i64: 32, 128>}, {pipeline_mode = #tpu.pipeline_mode<synchronous>, transform_indices = @transform_4, window_bounds = array<i64: 1, 128>}, {pipeline_mode = #tpu.pipeline_mode<synchronous>, transform_indices = @transform_5, window_bounds = array<i64: 32, 32>}, {pipeline_mode = #tpu.pipeline_mode<synchronous>, transform_indices = @transform_6, window_bounds = array<i64: 4, 32>}, {pipeline_mode = #tpu.pipeline_mode<synchronous>, transform_indices = @transform_7, window_bounds = array<i64: 32, 32>}, {pipeline_mode = #tpu.pipeline_mode<synchronous>, transform_indices = @transform_8, window_bounds = array<i64: 8, 32>}, {transform_indices = @transform_9, window_bounds = array<i64: 8, 1>}]} {
    %c0 = arith.constant 0 : index
    %c0_0 = arith.constant 0 : index
    %c0_1 = arith.constant 0 : index
    %0 = vector.load %arg1[%c0, %c0_0, %c0_1] : memref<1x64x4xbf16, #tpu.memory_space<vmem>>, vector<1x64x4xbf16>
    %1 = vector.shape_cast %0 : vector<1x64x4xbf16> to vector<64x4xbf16>
    %c0_2 = arith.constant 0 : index
    %c0_3 = arith.constant 0 : index
    %2 = vector.load %arg3[%c0_2, %c0_3] : memref<4x128xbf16, #tpu.memory_space<vmem>>, vector<4x128xbf16>
    %cst = arith.constant dense<0.000000e+00> : vector<64x128xf32>
    %3 = tpu.matmul %1, %2, %cst {dimension_numbers = #tpu.dot_dimension_numbers<[1], [0], [0], [1], [0, 0, 1, 1], [], []>} : vector<64x4xbf16>, vector<4x128xbf16>, vector<64x128xf32> -> vector<64x128xf32>
    %c0_4 = arith.constant 0 : index
    %c0_5 = arith.constant 0 : index
    %4 = vector.load %arg5[%c0_4, %c0_5] : memref<1x128xf32, #tpu.memory_space<vmem>>, vector<1x128xf32>
    %5 = vector.broadcast %4 : vector<1x128xf32> to vector<64x128xf32>
    %6 = arith.addf %3, %5 : vector<64x128xf32>
    %c0_6 = arith.constant 0 : index
    %c0_7 = arith.constant 0 : index
    %7 = vector.load %arg11[%c0_6, %c0_7] : memref<64x128xf32, #tpu.memory_space<vmem>>, vector<64x128xf32>
    tpu.vector_store %arg11[%c0_6, %c0_7], %6 {strides = array<i32>} : memref<64x128xf32, #tpu.memory_space<vmem>>, vector<64x128xf32>,
    %cst_8 = arith.constant 0.000000e+00 : f32
    %8 = vector.broadcast %cst_8 : f32 to vector<8x32xf32>
    %cst_9 = arith.constant 0.000000e+00 : f32
    %9 = vector.broadcast %cst_9 : f32 to vector<8x32xf32>
    %c0_i32 = arith.constant 0 : i32
    %c8_i32 = arith.constant 8 : i32
    %10 = arith.muli %c0_i32, %c8_i32 : i32
    %11 = tpu.assume_multiple %10, 8 : i32
    %12 = arith.truncf %8 : vector<8x32xf32> to vector<8x32xbf16>
    %c0_10 = arith.constant 0 : index
    %c0_11 = arith.constant 0 : index
    %13 = vector.load %arg4[%c0_10, %c0_11] : memref<32x128xbf16, #tpu.memory_space<vmem>>, vector<32x128xbf16>
    %cst_12 = arith.constant dense<0.000000e+00> : vector<8x128xf32>
    %14 = tpu.matmul %12, %13, %cst_12 {dimension_numbers = #tpu.dot_dimension_numbers<[1], [0], [0], [1], [0, 0, 1, 1], [], []>} : vector<8x32xbf16>, vector<32x128xbf16>, vector<8x128xf32> -> vector<8x128xf32>
    %15 = arith.index_cast %11 : i32 to index
    %c0_13 = arith.constant 0 : index
    %16 = vector.load %arg11[%15, %c0_13] : memref<64x128xf32, #tpu.memory_space<vmem>>, vector<8x128xf32>
    %17 = arith.addf %14, %16 : vector<8x128xf32>
    %cst_14 = arith.constant 5.000000e-01 : f32
    %18 = vector.broadcast %cst_14 : f32 to vector<8x128xf32>
    %19 = arith.mulf %18, %17 : vector<8x128xf32>
    %20 = math.tanh %19 : vector<8x128xf32>
    %cst_15 = arith.constant 5.000000e-01 : f32
    %21 = vector.broadcast %cst_15 : f32 to vector<8x128xf32>
    %22 = arith.mulf %21, %20 : vector<8x128xf32>
    %cst_16 = arith.constant 5.000000e-01 : f32
    %23 = vector.broadcast %cst_16 : f32 to vector<8x128xf32>
    %24 = arith.addf %22, %23 : vector<8x128xf32>
    %25 = math.tanh %17 : vector<8x128xf32>
    %26 = vector.extract_strided_slice %24 {offsets = [0, 0], sizes = [8, 32], strides = [1, 1]} : vector<8x128xf32> to vector<8x32xf32>
    %27 = vector.extract_strided_slice %24 {offsets = [0, 32], sizes = [8, 32], strides = [1, 1]} : vector<8x128xf32> to vector<8x32xf32>
    %28 = vector.extract_strided_slice %25 {offsets = [0, 64], sizes = [8, 32], strides = [1, 1]} : vector<8x128xf32> to vector<8x32xf32>
    %29 = vector.extract_strided_slice %24 {offsets = [0, 96], sizes = [8, 32], strides = [1, 1]} : vector<8x128xf32> to vector<8x32xf32>
    %30 = arith.mulf %27, %9 : vector<8x32xf32>
    %31 = arith.mulf %26, %28 : vector<8x32xf32>
    %32 = arith.addf %30, %31 : vector<8x32xf32>
    %33 = math.tanh %32 : vector<8x32xf32>
    %34 = arith.mulf %29, %33 : vector<8x32xf32>
    %c1_i32 = arith.constant 1 : i32
    %c8_i32_17 = arith.constant 8 : i32
    %35 = arith.muli %c1_i32, %c8_i32_17 : i32
    %36 = tpu.assume_multiple %35, 8 : i32
    %37 = arith.truncf %34 : vector<8x32xf32> to vector<8x32xbf16>
    %c0_18 = arith.constant 0 : index
    %c0_19 = arith.constant 0 : index
    %38 = vector.load %arg4[%c0_18, %c0_19] : memref<32x128xbf16, #tpu.memory_space<vmem>>, vector<32x128xbf16>
    %cst_20 = arith.constant dense<0.000000e+00> : vector<8x128xf32>
    %39 = tpu.matmul %37, %38, %cst_20 {dimension_numbers = #tpu.dot_dimension_numbers<[1], [0], [0], [1], [0, 0, 1, 1], [], []>} : vector<8x32xbf16>, vector<32x128xbf16>, vector<8x128xf32> -> vector<8x128xf32>
    %40 = arith.index_cast %36 : i32 to index
    %c0_21 = arith.constant 0 : index
    %41 = vector.load %arg11[%40, %c0_21] : memref<64x128xf32, #tpu.memory_space<vmem>>, vector<8x128xf32>
    %42 = arith.addf %39, %41 : vector<8x128xf32>
    %cst_22 = arith.constant 5.000000e-01 : f32
    %43 = vector.broadcast %cst_22 : f32 to vector<8x128xf32>
    %44 = arith.mulf %43, %42 : vector<8x128xf32>
    %45 = math.tanh %44 : vector<8x128xf32>
    %cst_23 = arith.constant 5.000000e-01 : f32
    %46 = vector.broadcast %cst_23 : f32 to vector<8x128xf32>
    %47 = arith.mulf %46, %45 : vector<8x128xf32>
    %cst_24 = arith.constant 5.000000e-01 : f32
    %48 = vector.broadcast %cst_24 : f32 to vector<8x128xf32>
    %49 = arith.addf %47, %48 : vector<8x128xf32>
    %50 = math.tanh %42 : vector<8x128xf32>
    %51 = vector.extract_strided_slice %49 {offsets = [0, 0], sizes = [8, 32], strides = [1, 1]} : vector<8x128xf32> to vector<8x32xf32>
    %52 = vector.extract_strided_slice %49 {offsets = [0, 32], sizes = [8, 32], strides = [1, 1]} : vector<8x128xf32> to vector<8x32xf32>
    %53 = vector.extract_strided_slice %50 {offsets = [0, 64], sizes = [8, 32], strides = [1, 1]} : vector<8x128xf32> to vector<8x32xf32>
    %54 = vector.extract_strided_slice %49 {offsets = [0, 96], sizes = [8, 32], strides = [1, 1]} : vector<8x128xf32> to vector<8x32xf32>
    %55 = arith.mulf %52, %32 : vector<8x32xf32>
    %56 = arith.mulf %51, %53 : vector<8x32xf32>
    %57 = arith.addf %55, %56 : vector<8x32xf32>
    %58 = math.tanh %57 : vector<8x32xf32>
    %59 = arith.mulf %54, %58 : vector<8x32xf32>
    %c2_i32 = arith.constant 2 : i32
    %c8_i32_25 = arith.constant 8 : i32
    %60 = arith.muli %c2_i32, %c8_i32_25 : i32
    %61 = tpu.assume_multiple %60, 8 : i32
    %62 = arith.truncf %59 : vector<8x32xf32> to vector<8x32xbf16>
    %c0_26 = arith.constant 0 : index
    %c0_27 = arith.constant 0 : index
    %63 = vector.load %arg4[%c0_26, %c0_27] : memref<32x128xbf16, #tpu.memory_space<vmem>>, vector<32x128xbf16>
    %cst_28 = arith.constant dense<0.000000e+00> : vector<8x128xf32>
    %64 = tpu.matmul %62, %63, %cst_28 {dimension_numbers = #tpu.dot_dimension_numbers<[1], [0], [0], [1], [0, 0, 1, 1], [], []>} : vector<8x32xbf16>, vector<32x128xbf16>, vector<8x128xf32> -> vector<8x128xf32>
    %65 = arith.index_cast %61 : i32 to index
    %c0_29 = arith.constant 0 : index
    %66 = vector.load %arg11[%65, %c0_29] : memref<64x128xf32, #tpu.memory_space<vmem>>, vector<8x128xf32>
    %67 = arith.addf %64, %66 : vector<8x128xf32>
    %cst_30 = arith.constant 5.000000e-01 : f32
    %68 = vector.broadcast %cst_30 : f32 to vector<8x128xf32>
    %69 = arith.mulf %68, %67 : vector<8x128xf32>
    %70 = math.tanh %69 : vector<8x128xf32>
    %cst_31 = arith.constant 5.000000e-01 : f32
    %71 = vector.broadcast %cst_31 : f32 to vector<8x128xf32>
    %72 = arith.mulf %71, %70 : vector<8x128xf32>
    %cst_32 = arith.constant 5.000000e-01 : f32
    %73 = vector.broadcast %cst_32 : f32 to vector<8x128xf32>
    %74 = arith.addf %72, %73 : vector<8x128xf32>
    %75 = math.tanh %67 : vector<8x128xf32>
    %76 = vector.extract_strided_slice %74 {offsets = [0, 0], sizes = [8, 32], strides = [1, 1]} : vector<8x128xf32> to vector<8x32xf32>
    %77 = vector.extract_strided_slice %74 {offsets = [0, 32], sizes = [8, 32], strides = [1, 1]} : vector<8x128xf32> to vector<8x32xf32>
    %78 = vector.extract_strided_slice %75 {offsets = [0, 64], sizes = [8, 32], strides = [1, 1]} : vector<8x128xf32> to vector<8x32xf32>
    %79 = vector.extract_strided_slice %74 {offsets = [0, 96], sizes = [8, 32], strides = [1, 1]} : vector<8x128xf32> to vector<8x32xf32>
    %80 = arith.mulf %77, %57 : vector<8x32xf32>
    %81 = arith.mulf %76, %78 : vector<8x32xf32>
    %82 = arith.addf %80, %81 : vector<8x32xf32>
    %83 = math.tanh %82 : vector<8x32xf32>
    %84 = arith.mulf %79, %83 : vector<8x32xf32>
    %c3_i32 = arith.constant 3 : i32
    %c8_i32_33 = arith.constant 8 : i32
    %85 = arith.muli %c3_i32, %c8_i32_33 : i32
    %86 = tpu.assume_multiple %85, 8 : i32
    %87 = arith.truncf %84 : vector<8x32xf32> to vector<8x32xbf16>
    %c0_34 = arith.constant 0 : index
    %c0_35 = arith.constant 0 : index
    %88 = vector.load %arg4[%c0_34, %c0_35] : memref<32x128xbf16, #tpu.memory_space<vmem>>, vector<32x128xbf16>
    %cst_36 = arith.constant dense<0.000000e+00> : vector<8x128xf32>
    %89 = tpu.matmul %87, %88, %cst_36 {dimension_numbers = #tpu.dot_dimension_numbers<[1], [0], [0], [1], [0, 0, 1, 1], [], []>} : vector<8x32xbf16>, vector<32x128xbf16>, vector<8x128xf32> -> vector<8x128xf32>
    %90 = arith.index_cast %86 : i32 to index
    %c0_37 = arith.constant 0 : index
    %91 = vector.load %arg11[%90, %c0_37] : memref<64x128xf32, #tpu.memory_space<vmem>>, vector<8x128xf32>
    %92 = arith.addf %89, %91 : vector<8x128xf32>
    %cst_38 = arith.constant 5.000000e-01 : f32
    %93 = vector.broadcast %cst_38 : f32 to vector<8x128xf32>
    %94 = arith.mulf %93, %92 : vector<8x128xf32>
    %95 = math.tanh %94 : vector<8x128xf32>
    %cst_39 = arith.constant 5.000000e-01 : f32
    %96 = vector.broadcast %cst_39 : f32 to vector<8x128xf32>
    %97 = arith.mulf %96, %95 : vector<8x128xf32>
    %cst_40 = arith.constant 5.000000e-01 : f32
    %98 = vector.broadcast %cst_40 : f32 to vector<8x128xf32>
    %99 = arith.addf %97, %98 : vector<8x128xf32>
    %100 = math.tanh %92 : vector<8x128xf32>
    %101 = vector.extract_strided_slice %99 {offsets = [0, 0], sizes = [8, 32], strides = [1, 1]} : vector<8x128xf32> to vector<8x32xf32>
    %102 = vector.extract_strided_slice %99 {offsets = [0, 32], sizes = [8, 32], strides = [1, 1]} : vector<8x128xf32> to vector<8x32xf32>
    %103 = vector.extract_strided_slice %100 {offsets = [0, 64], sizes = [8, 32], strides = [1, 1]} : vector<8x128xf32> to vector<8x32xf32>
    %104 = vector.extract_strided_slice %99 {offsets = [0, 96], sizes = [8, 32], strides = [1, 1]} : vector<8x128xf32> to vector<8x32xf32>
    %105 = arith.mulf %102, %82 : vector<8x32xf32>
    %106 = arith.mulf %101, %103 : vector<8x32xf32>
    %107 = arith.addf %105, %106 : vector<8x32xf32>
    %108 = math.tanh %107 : vector<8x32xf32>
    %109 = arith.mulf %104, %108 : vector<8x32xf32>
    %c4_i32 = arith.constant 4 : i32
    %c8_i32_41 = arith.constant 8 : i32
    %110 = arith.muli %c4_i32, %c8_i32_41 : i32
    %111 = tpu.assume_multiple %110, 8 : i32
    %112 = arith.truncf %109 : vector<8x32xf32> to vector<8x32xbf16>
    %c0_42 = arith.constant 0 : index
    %c0_43 = arith.constant 0 : index
    %113 = vector.load %arg4[%c0_42, %c0_43] : memref<32x128xbf16, #tpu.memory_space<vmem>>, vector<32x128xbf16>
    %cst_44 = arith.constant dense<0.000000e+00> : vector<8x128xf32>
    %114 = tpu.matmul %112, %113, %cst_44 {dimension_numbers = #tpu.dot_dimension_numbers<[1], [0], [0], [1], [0, 0, 1, 1], [], []>} : vector<8x32xbf16>, vector<32x128xbf16>, vector<8x128xf32> -> vector<8x128xf32>
    %115 = arith.index_cast %111 : i32 to index
    %c0_45 = arith.constant 0 : index
    %116 = vector.load %arg11[%115, %c0_45] : memref<64x128xf32, #tpu.memory_space<vmem>>, vector<8x128xf32>
    %117 = arith.addf %114, %116 : vector<8x128xf32>
    %cst_46 = arith.constant 5.000000e-01 : f32
    %118 = vector.broadcast %cst_46 : f32 to vector<8x128xf32>
    %119 = arith.mulf %118, %117 : vector<8x128xf32>
    %120 = math.tanh %119 : vector<8x128xf32>
    %cst_47 = arith.constant 5.000000e-01 : f32
    %121 = vector.broadcast %cst_47 : f32 to vector<8x128xf32>
    %122 = arith.mulf %121, %120 : vector<8x128xf32>
    %cst_48 = arith.constant 5.000000e-01 : f32
    %123 = vector.broadcast %cst_48 : f32 to vector<8x128xf32>
    %124 = arith.addf %122, %123 : vector<8x128xf32>
    %125 = math.tanh %117 : vector<8x128xf32>
    %126 = vector.extract_strided_slice %124 {offsets = [0, 0], sizes = [8, 32], strides = [1, 1]} : vector<8x128xf32> to vector<8x32xf32>
    %127 = vector.extract_strided_slice %124 {offsets = [0, 32], sizes = [8, 32], strides = [1, 1]} : vector<8x128xf32> to vector<8x32xf32>
    %128 = vector.extract_strided_slice %125 {offsets = [0, 64], sizes = [8, 32], strides = [1, 1]} : vector<8x128xf32> to vector<8x32xf32>
    %129 = vector.extract_strided_slice %124 {offsets = [0, 96], sizes = [8, 32], strides = [1, 1]} : vector<8x128xf32> to vector<8x32xf32>
    %130 = arith.mulf %127, %107 : vector<8x32xf32>
    %131 = arith.mulf %126, %128 : vector<8x32xf32>
    %132 = arith.addf %130, %131 : vector<8x32xf32>
    %133 = math.tanh %132 : vector<8x32xf32>
    %134 = arith.mulf %129, %133 : vector<8x32xf32>
    %c5_i32 = arith.constant 5 : i32
    %c8_i32_49 = arith.constant 8 : i32
    %135 = arith.muli %c5_i32, %c8_i32_49 : i32
    %136 = tpu.assume_multiple %135, 8 : i32
    %137 = arith.truncf %134 : vector<8x32xf32> to vector<8x32xbf16>
    %c0_50 = arith.constant 0 : index
    %c0_51 = arith.constant 0 : index
    %138 = vector.load %arg4[%c0_50, %c0_51] : memref<32x128xbf16, #tpu.memory_space<vmem>>, vector<32x128xbf16>
    %cst_52 = arith.constant dense<0.000000e+00> : vector<8x128xf32>
    %139 = tpu.matmul %137, %138, %cst_52 {dimension_numbers = #tpu.dot_dimension_numbers<[1], [0], [0], [1], [0, 0, 1, 1], [], []>} : vector<8x32xbf16>, vector<32x128xbf16>, vector<8x128xf32> -> vector<8x128xf32>
    %140 = arith.index_cast %136 : i32 to index
    %c0_53 = arith.constant 0 : index
    %141 = vector.load %arg11[%140, %c0_53] : memref<64x128xf32, #tpu.memory_space<vmem>>, vector<8x128xf32>
    %142 = arith.addf %139, %141 : vector<8x128xf32>
    %cst_54 = arith.constant 5.000000e-01 : f32
    %143 = vector.broadcast %cst_54 : f32 to vector<8x128xf32>
    %144 = arith.mulf %143, %142 : vector<8x128xf32>
    %145 = math.tanh %144 : vector<8x128xf32>
    %cst_55 = arith.constant 5.000000e-01 : f32
    %146 = vector.broadcast %cst_55 : f32 to vector<8x128xf32>
    %147 = arith.mulf %146, %145 : vector<8x128xf32>
    %cst_56 = arith.constant 5.000000e-01 : f32
    %148 = vector.broadcast %cst_56 : f32 to vector<8x128xf32>
    %149 = arith.addf %147, %148 : vector<8x128xf32>
    %150 = math.tanh %142 : vector<8x128xf32>
    %151 = vector.extract_strided_slice %149 {offsets = [0, 0], sizes = [8, 32], strides = [1, 1]} : vector<8x128xf32> to vector<8x32xf32>
    %152 = vector.extract_strided_slice %149 {offsets = [0, 32], sizes = [8, 32], strides = [1, 1]} : vector<8x128xf32> to vector<8x32xf32>
    %153 = vector.extract_strided_slice %150 {offsets = [0, 64], sizes = [8, 32], strides = [1, 1]} : vector<8x128xf32> to vector<8x32xf32>
    %154 = vector.extract_strided_slice %149 {offsets = [0, 96], sizes = [8, 32], strides = [1, 1]} : vector<8x128xf32> to vector<8x32xf32>
    %155 = arith.mulf %152, %132 : vector<8x32xf32>
    %156 = arith.mulf %151, %153 : vector<8x32xf32>
    %157 = arith.addf %155, %156 : vector<8x32xf32>
    %158 = math.tanh %157 : vector<8x32xf32>
    %159 = arith.mulf %154, %158 : vector<8x32xf32>
    %c6_i32 = arith.constant 6 : i32
    %c8_i32_57 = arith.constant 8 : i32
    %160 = arith.muli %c6_i32, %c8_i32_57 : i32
    %161 = tpu.assume_multiple %160, 8 : i32
    %162 = arith.truncf %159 : vector<8x32xf32> to vector<8x32xbf16>
    %c0_58 = arith.constant 0 : index
    %c0_59 = arith.constant 0 : index
    %163 = vector.load %arg4[%c0_58, %c0_59] : memref<32x128xbf16, #tpu.memory_space<vmem>>, vector<32x128xbf16>
    %cst_60 = arith.constant dense<0.000000e+00> : vector<8x128xf32>
    %164 = tpu.matmul %162, %163, %cst_60 {dimension_numbers = #tpu.dot_dimension_numbers<[1], [0], [0], [1], [0, 0, 1, 1], [], []>} : vector<8x32xbf16>, vector<32x128xbf16>, vector<8x128xf32> -> vector<8x128xf32>
    %165 = arith.index_cast %161 : i32 to index
    %c0_61 = arith.constant 0 : index
    %166 = vector.load %arg11[%165, %c0_61] : memref<64x128xf32, #tpu.memory_space<vmem>>, vector<8x128xf32>
    %167 = arith.addf %164, %166 : vector<8x128xf32>
    %cst_62 = arith.constant 5.000000e-01 : f32
    %168 = vector.broadcast %cst_62 : f32 to vector<8x128xf32>
    %169 = arith.mulf %168, %167 : vector<8x128xf32>
    %170 = math.tanh %169 : vector<8x128xf32>
    %cst_63 = arith.constant 5.000000e-01 : f32
    %171 = vector.broadcast %cst_63 : f32 to vector<8x128xf32>
    %172 = arith.mulf %171, %170 : vector<8x128xf32>
    %cst_64 = arith.constant 5.000000e-01 : f32
    %173 = vector.broadcast %cst_64 : f32 to vector<8x128xf32>
    %174 = arith.addf %172, %173 : vector<8x128xf32>
    %175 = math.tanh %167 : vector<8x128xf32>
    %176 = vector.extract_strided_slice %174 {offsets = [0, 0], sizes = [8, 32], strides = [1, 1]} : vector<8x128xf32> to vector<8x32xf32>
    %177 = vector.extract_strided_slice %174 {offsets = [0, 32], sizes = [8, 32], strides = [1, 1]} : vector<8x128xf32> to vector<8x32xf32>
    %178 = vector.extract_strided_slice %175 {offsets = [0, 64], sizes = [8, 32], strides = [1, 1]} : vector<8x128xf32> to vector<8x32xf32>
    %179 = vector.extract_strided_slice %174 {offsets = [0, 96], sizes = [8, 32], strides = [1, 1]} : vector<8x128xf32> to vector<8x32xf32>
    %180 = arith.mulf %177, %157 : vector<8x32xf32>
    %181 = arith.mulf %176, %178 : vector<8x32xf32>
    %182 = arith.addf %180, %181 : vector<8x32xf32>
    %183 = math.tanh %182 : vector<8x32xf32>
    %184 = arith.mulf %179, %183 : vector<8x32xf32>
    %c7_i32 = arith.constant 7 : i32
    %c8_i32_65 = arith.constant 8 : i32
    %185 = arith.muli %c7_i32, %c8_i32_65 : i32
    %186 = tpu.assume_multiple %185, 8 : i32
    %187 = arith.truncf %184 : vector<8x32xf32> to vector<8x32xbf16>
    %c0_66 = arith.constant 0 : index
    %c0_67 = arith.constant 0 : index
    %188 = vector.load %arg4[%c0_66, %c0_67] : memref<32x128xbf16, #tpu.memory_space<vmem>>, vector<32x128xbf16>
    %cst_68 = arith.constant dense<0.000000e+00> : vector<8x128xf32>
    %189 = tpu.matmul %187, %188, %cst_68 {dimension_numbers = #tpu.dot_dimension_numbers<[1], [0], [0], [1], [0, 0, 1, 1], [], []>} : vector<8x32xbf16>, vector<32x128xbf16>, vector<8x128xf32> -> vector<8x128xf32>
    %190 = arith.index_cast %186 : i32 to index
    %c0_69 = arith.constant 0 : index
    %191 = vector.load %arg11[%190, %c0_69] : memref<64x128xf32, #tpu.memory_space<vmem>>, vector<8x128xf32>
    %192 = arith.addf %189, %191 : vector<8x128xf32>
    %cst_70 = arith.constant 5.000000e-01 : f32
    %193 = vector.broadcast %cst_70 : f32 to vector<8x128xf32>
    %194 = arith.mulf %193, %192 : vector<8x128xf32>
    %195 = math.tanh %194 : vector<8x128xf32>
    %cst_71 = arith.constant 5.000000e-01 : f32
    %196 = vector.broadcast %cst_71 : f32 to vector<8x128xf32>
    %197 = arith.mulf %196, %195 : vector<8x128xf32>
    %cst_72 = arith.constant 5.000000e-01 : f32
    %198 = vector.broadcast %cst_72 : f32 to vector<8x128xf32>
    %199 = arith.addf %197, %198 : vector<8x128xf32>
    %200 = math.tanh %192 : vector<8x128xf32>
    %201 = vector.extract_strided_slice %199 {offsets = [0, 0], sizes = [8, 32], strides = [1, 1]} : vector<8x128xf32> to vector<8x32xf32>
    %202 = vector.extract_strided_slice %199 {offsets = [0, 32], sizes = [8, 32], strides = [1, 1]} : vector<8x128xf32> to vector<8x32xf32>
    %203 = vector.extract_strided_slice %200 {offsets = [0, 64], sizes = [8, 32], strides = [1, 1]} : vector<8x128xf32> to vector<8x32xf32>
    %204 = vector.extract_strided_slice %199 {offsets = [0, 96], sizes = [8, 32], strides = [1, 1]} : vector<8x128xf32> to vector<8x32xf32>
    %205 = arith.mulf %202, %182 : vector<8x32xf32>
    %206 = arith.mulf %201, %203 : vector<8x32xf32>
    %207 = arith.addf %205, %206 : vector<8x32xf32>
    %208 = math.tanh %207 : vector<8x32xf32>
    %209 = arith.mulf %204, %208 : vector<8x32xf32>
    %c8_i32_73 = arith.constant 8 : i32
    %c0_74 = arith.constant 0 : index
    %c0_75 = arith.constant 0 : index
    %210 = vector.load %arg9[%c0_74, %c0_75] : memref<8x32xf32, #tpu.memory_space<vmem>>, vector<8x32xf32>
    %211 = vector.extract_strided_slice %210 {offsets = [0, 0], sizes = [1, 32], strides = [1, 1]} : vector<8x32xf32> to vector<1x32xf32>
    %212 = vector.extract_strided_slice %210 {offsets = [1, 0], sizes = [1, 32], strides = [1, 1]} : vector<8x32xf32> to vector<1x32xf32>
    %213 = vector.extract_strided_slice %210 {offsets = [2, 0], sizes = [1, 32], strides = [1, 1]} : vector<8x32xf32> to vector<1x32xf32>
    %214 = vector.extract_strided_slice %210 {offsets = [3, 0], sizes = [1, 32], strides = [1, 1]} : vector<8x32xf32> to vector<1x32xf32>
    %215 = vector.extract_strided_slice %210 {offsets = [4, 0], sizes = [1, 32], strides = [1, 1]} : vector<8x32xf32> to vector<1x32xf32>
    %216 = vector.extract_strided_slice %210 {offsets = [5, 0], sizes = [1, 32], strides = [1, 1]} : vector<8x32xf32> to vector<1x32xf32>
    %217 = vector.extract_strided_slice %210 {offsets = [6, 0], sizes = [1, 32], strides = [1, 1]} : vector<8x32xf32> to vector<1x32xf32>
    %218 = vector.extract_strided_slice %210 {offsets = [7, 0], sizes = [1, 1], strides = [1, 1]} : vector<8x32xf32> to vector<1x1xf32>
    %c0_76 = arith.constant 0 : index
    %c0_77 = arith.constant 0 : index
    %219 = vector.load %arg6[%c0_76, %c0_77] : memref<32x32xf32, #tpu.memory_space<vmem>>, vector<32x32xf32>
    %cst_78 = arith.constant dense<0.000000e+00> : vector<8x32xf32>
    %220 = tpu.matmul %209, %219, %cst_78 {dimension_numbers = #tpu.dot_dimension_numbers<[1], [0], [0], [1], [0, 0, 1, 1], [], []>} : vector<8x32xf32>, vector<32x32xf32>, vector<8x32xf32> -> vector<8x32xf32>
    %c0_79 = arith.constant 0 : index
    %c0_80 = arith.constant 0 : index
    %221 = vector.load %arg2[%c0_79, %c0_80] : memref<8x4xf32, #tpu.memory_space<vmem>>, vector<8x4xf32>
    %c0_81 = arith.constant 0 : index
    %c0_82 = arith.constant 0 : index
    %222 = vector.load %arg7[%c0_81, %c0_82] : memref<4x32xf32, #tpu.memory_space<vmem>>, vector<4x32xf32>
    %cst_83 = arith.constant dense<0.000000e+00> : vector<8x32xf32>
    %223 = tpu.matmul %221, %222, %cst_83 {dimension_numbers = #tpu.dot_dimension_numbers<[1], [0], [0], [1], [0, 0, 1, 1], [], []>} : vector<8x4xf32>, vector<4x32xf32>, vector<8x32xf32> -> vector<8x32xf32>
    %224 = arith.addf %220, %223 : vector<8x32xf32>
    %225 = vector.broadcast %211 : vector<1x32xf32> to vector<8x32xf32>
    %226 = arith.addf %224, %225 : vector<8x32xf32>
    %cst_84 = arith.constant dense<0.000000e+00> : vector<8xf32>
    %227 = vector.multi_reduction <add>, %226, %cst_84 [1] : vector<8x32xf32> to vector<8xf32>
    %228 = vector.shape_cast %227 : vector<8xf32> to vector<8x1xf32>
    %cst_85 = arith.constant 3.200000e+01 : f32
    %229 = vector.broadcast %cst_85 : f32 to vector<8x1xf32>
    %230 = arith.divf %228, %229 : vector<8x1xf32>
    %231 = vector.broadcast %230 : vector<8x1xf32> to vector<8x32xf32>
    %232 = arith.subf %226, %231 : vector<8x32xf32>
    %233 = arith.mulf %232, %232 : vector<8x32xf32>
    %cst_86 = arith.constant dense<0.000000e+00> : vector<8xf32>
    %234 = vector.multi_reduction <add>, %233, %cst_86 [1] : vector<8x32xf32> to vector<8xf32>
    %235 = vector.shape_cast %234 : vector<8xf32> to vector<8x1xf32>
    %cst_87 = arith.constant 3.200000e+01 : f32
    %236 = vector.broadcast %cst_87 : f32 to vector<8x1xf32>
    %237 = arith.divf %235, %236 : vector<8x1xf32>
    %238 = vector.broadcast %230 : vector<8x1xf32> to vector<8x32xf32>
    %239 = arith.subf %226, %238 : vector<8x32xf32>
    %cst_88 = arith.constant 9.99999974E-6 : f32
    %240 = vector.broadcast %cst_88 : f32 to vector<8x1xf32>
    %241 = arith.addf %237, %240 : vector<8x1xf32>
    %242 = math.rsqrt %241 : vector<8x1xf32>
    %243 = vector.broadcast %242 : vector<8x1xf32> to vector<8x32xf32>
    %244 = arith.mulf %239, %243 : vector<8x32xf32>
    %245 = vector.broadcast %212 : vector<1x32xf32> to vector<8x32xf32>
    %246 = arith.mulf %244, %245 : vector<8x32xf32>
    %247 = vector.broadcast %213 : vector<1x32xf32> to vector<8x32xf32>
    %248 = arith.addf %246, %247 : vector<8x32xf32>
    %cst_89 = arith.constant 0.000000e+00 : f32
    %249 = vector.broadcast %cst_89 : f32 to vector<8x32xf32>
    %250 = arith.maximumf %248, %249 : vector<8x32xf32>
    %c0_90 = arith.constant 0 : index
    %c0_91 = arith.constant 0 : index
    %251 = vector.load %arg8[%c0_90, %c0_91] : memref<32x32xf32, #tpu.memory_space<vmem>>, vector<32x32xf32>
    %cst_92 = arith.constant dense<0.000000e+00> : vector<8x32xf32>
    %252 = tpu.matmul %250, %251, %cst_92 {dimension_numbers = #tpu.dot_dimension_numbers<[1], [0], [0], [1], [0, 0, 1, 1], [], []>} : vector<8x32xf32>, vector<32x32xf32>, vector<8x32xf32> -> vector<8x32xf32>
    %253 = vector.broadcast %214 : vector<1x32xf32> to vector<8x32xf32>
    %254 = arith.addf %252, %253 : vector<8x32xf32>
    %cst_93 = arith.constant dense<0.000000e+00> : vector<8xf32>
    %255 = vector.multi_reduction <add>, %254, %cst_93 [1] : vector<8x32xf32> to vector<8xf32>
    %256 = vector.shape_cast %255 : vector<8xf32> to vector<8x1xf32>
    %cst_94 = arith.constant 3.200000e+01 : f32
    %257 = vector.broadcast %cst_94 : f32 to vector<8x1xf32>
    %258 = arith.divf %256, %257 : vector<8x1xf32>
    %259 = vector.broadcast %258 : vector<8x1xf32> to vector<8x32xf32>
    %260 = arith.subf %254, %259 : vector<8x32xf32>
    %261 = arith.mulf %260, %260 : vector<8x32xf32>
    %cst_95 = arith.constant dense<0.000000e+00> : vector<8xf32>
    %262 = vector.multi_reduction <add>, %261, %cst_95 [1] : vector<8x32xf32> to vector<8xf32>
    %263 = vector.shape_cast %262 : vector<8xf32> to vector<8x1xf32>
    %cst_96 = arith.constant 3.200000e+01 : f32
    %264 = vector.broadcast %cst_96 : f32 to vector<8x1xf32>
    %265 = arith.divf %263, %264 : vector<8x1xf32>
    %266 = vector.broadcast %258 : vector<8x1xf32> to vector<8x32xf32>
    %267 = arith.subf %254, %266 : vector<8x32xf32>
    %cst_97 = arith.constant 9.99999974E-6 : f32
    %268 = vector.broadcast %cst_97 : f32 to vector<8x1xf32>
    %269 = arith.addf %265, %268 : vector<8x1xf32>
    %270 = math.rsqrt %269 : vector<8x1xf32>
    %271 = vector.broadcast %270 : vector<8x1xf32> to vector<8x32xf32>
    %272 = arith.mulf %267, %271 : vector<8x32xf32>
    %273 = vector.broadcast %215 : vector<1x32xf32> to vector<8x32xf32>
    %274 = arith.mulf %272, %273 : vector<8x32xf32>
    %275 = vector.broadcast %216 : vector<1x32xf32> to vector<8x32xf32>
    %276 = arith.addf %274, %275 : vector<8x32xf32>
    %cst_98 = arith.constant 0.000000e+00 : f32
    %277 = vector.broadcast %cst_98 : f32 to vector<8x32xf32>
    %278 = arith.maximumf %276, %277 : vector<8x32xf32>
    %279 = vector.broadcast %217 : vector<1x32xf32> to vector<8x32xf32>
    %280 = arith.mulf %278, %279 : vector<8x32xf32>
    %cst_99 = arith.constant dense<0.000000e+00> : vector<8xf32>
    %281 = vector.multi_reduction <add>, %280, %cst_99 [1] : vector<8x32xf32> to vector<8xf32>
    %282 = vector.shape_cast %281 : vector<8xf32> to vector<8x1xf32>
    %283 = vector.broadcast %218 : vector<1x1xf32> to vector<8x1xf32>
    %284 = arith.addf %282, %283 : vector<8x1xf32>
    %c0_100 = arith.constant 0 : index
    %c0_101 = arith.constant 0 : index
    %285 = vector.load %arg10[%c0_100, %c0_101] : memref<8x1xf32, #tpu.memory_space<vmem>>, vector<8x1xf32>
    tpu.vector_store %arg10[%c0_100, %c0_101], %284 {strides = array<i32>} : memref<8x1xf32, #tpu.memory_space<vmem>>, vector<8x1xf32>,
    return
  }
  func.func @transform_0(%arg0: i32) -> (i32, i32, i32) {
    %c0_i32 = arith.constant 0 : i32
    %c0_i32_0 = arith.constant 0 : i32
    %c0_i32_1 = arith.constant 0 : i32
    return %arg0, %c0_i32, %c0_i32_0 : i32, i32, i32
  }
  func.func @transform_1(%arg0: i32) -> (i32, i32) {
    %c0_i32 = arith.constant 0 : i32
    %c0_i32_0 = arith.constant 0 : i32
    return %arg0, %c0_i32 : i32, i32
  }
  func.func @transform_2(%arg0: i32) -> (i32, i32) {
    %c0_i32 = arith.constant 0 : i32
    %c0_i32_0 = arith.constant 0 : i32
    %c0_i32_1 = arith.constant 0 : i32
    return %c0_i32, %c0_i32_0 : i32, i32
  }
  func.func @transform_3(%arg0: i32) -> (i32, i32) {
    %c0_i32 = arith.constant 0 : i32
    %c0_i32_0 = arith.constant 0 : i32
    %c0_i32_1 = arith.constant 0 : i32
    return %c0_i32, %c0_i32_0 : i32, i32
  }
  func.func @transform_4(%arg0: i32) -> (i32, i32) {
    %c0_i32 = arith.constant 0 : i32
    %c0_i32_0 = arith.constant 0 : i32
    %c0_i32_1 = arith.constant 0 : i32
    return %c0_i32, %c0_i32_0 : i32, i32
  }
  func.func @transform_5(%arg0: i32) -> (i32, i32) {
    %c0_i32 = arith.constant 0 : i32
    %c0_i32_0 = arith.constant 0 : i32
    %c0_i32_1 = arith.constant 0 : i32
    return %c0_i32, %c0_i32_0 : i32, i32
  }
  func.func @transform_6(%arg0: i32) -> (i32, i32) {
    %c0_i32 = arith.constant 0 : i32
    %c0_i32_0 = arith.constant 0 : i32
    %c0_i32_1 = arith.constant 0 : i32
    return %c0_i32, %c0_i32_0 : i32, i32
  }
  func.func @transform_7(%arg0: i32) -> (i32, i32) {
    %c0_i32 = arith.constant 0 : i32
    %c0_i32_0 = arith.constant 0 : i32
    %c0_i32_1 = arith.constant 0 : i32
    return %c0_i32, %c0_i32_0 : i32, i32
  }
  func.func @transform_8(%arg0: i32) -> (i32, i32) {
    %c0_i32 = arith.constant 0 : i32
    %c0_i32_0 = arith.constant 0 : i32
    %c0_i32_1 = arith.constant 0 : i32
    return %c0_i32, %c0_i32_0 : i32, i32
  }
  func.func @transform_9(%arg0: i32) -> (i32, i32) {
    %c0_i32 = arith.constant 0 : i32
    %c0_i32_0 = arith.constant 0 : i32
    return %arg0, %c0_i32 : i32, i32
  }
}

</mosaic_0001>

<llo_original>
// kernel: tpu_custom_call.1
$region0: #{tpu_custom_call.1}
  #allocation0 [shape = 'u32[]', space=smem, size = 0x4, offset = 0x4, fixed_abs, tag = 'smem constant byte address 0x4 - core index']
  #allocation1 [shape = 'u32[144,128]{1,0:T(1,128)}', space=vmem, size = 0x12000, scoped, tag = 'internal scratch']
  #allocation2 [shape = 'f32[64,128]{1,0:T(8,128)}', space=vmem, size = 0x8000, scoped, tag = 'scratch operand']
  %s0 = inlined_call_operand.vmem [shape: bf16[1,64,4], index: 0, kind: input, shape index: {}]
  %s1 = inlined_call_operand.vmem [shape: f32[8,4], index: 1, kind: input, shape index: {}]
  %s2 = inlined_call_operand.hbm [shape: bf16[4,128], index: 2, kind: input, shape index: {}]
  %s3 = inlined_call_operand.hbm [shape: bf16[32,128], index: 3, kind: input, shape index: {}]
  %s4 = inlined_call_operand.hbm [shape: f32[1,128], index: 4, kind: input, shape index: {}]
  %s5 = inlined_call_operand.vmem [shape: f32[32,32], index: 5, kind: input, shape index: {}]
  %s6 = inlined_call_operand.hbm [shape: f32[4,32], index: 6, kind: input, shape index: {}]
  %s7 = inlined_call_operand.vmem [shape: f32[32,32], index: 7, kind: input, shape index: {}]
  %s8 = inlined_call_operand.vmem [shape: f32[8,32], index: 8, kind: input, shape index: {}]
  %s9 = inlined_call_operand.vmem [shape: f32[8,1], index: 9, kind: output, shape index: {}]
  %s10 = sld [smem:[#allocation0]]
  $region62: #{tpu_custom_call.1} parent=0
    _
  %s12 = ssub.s32 1, %s10
  %s13 = scalar_select 0, %s12, %s10
  $region1: #{tpu_custom_call.1} parent=0
    #allocation3 [shape = 'u8[1024]{0}', space=vmem, size = 0x400, scoped, tag = 'input window, operand 2, single buffered']
    #allocation4 [shape = 's32[1]{0}', space=sflag, size = 0x4, scoped, tag = 'scoped memory for tpu_custom_call.1']
    #allocation5 [shape = 'u8[8192]{0}', space=vmem, size = 0x2000, scoped, tag = 'input window, operand 3, single buffered']
    #allocation6 [shape = 's32[1]{0}', space=sflag, size = 0x4, scoped, tag = 'scoped memory for tpu_custom_call.1']
    #allocation7 [shape = 'u8[512]{0}', space=vmem, size = 0x400, scoped, tag = 'input window, operand 4, single buffered']
    #allocation8 [shape = 'u8[2048]{0}', space=vmem, size = 0x800, scoped, tag = 'input window, operand 6, single buffered']
    #allocation9 [shape = 's32[1]{0}', space=sflag, size = 0x4, scoped, tag = 'scoped memory for tpu_custom_call.1']
    %14 = vsyncpa [#allocation4], 0
    %15 = vsyncpa [#allocation6], 0
    %16 = vsyncpa [#allocation9], 0
    // Predicated region
    $region2: #{tpu_custom_call.1} parent=1 // pred_check
      _
    $region3: #{tpu_custom_call.1} parent=1 // pred_check_branch
      %18 = sbr.rel (0) target = $region5
    $region4: #{tpu_custom_call.1} parent=1 // pred_region
      _
    $region5: #{tpu_custom_call.1} parent=1 // pred_fallthru
      _
    // Predicated region
    $region6: #{tpu_custom_call.1} parent=1 // pred_check
      _
    $region7: #{tpu_custom_call.1} parent=1 // pred_check_branch
      %20 = sbr.rel (0) target = $region9
    $region8: #{tpu_custom_call.1} parent=1 // pred_region
      _
    $region9: #{tpu_custom_call.1} parent=1 // pred_fallthru
      _
    // Predicated region
    $region10: #{tpu_custom_call.1} parent=1 // pred_check
      _
    $region11: #{tpu_custom_call.1} parent=1 // pred_check_branch
      %22 = sbr.rel (0) target = $region13
    $region12: #{tpu_custom_call.1} parent=1 // pred_region
      %s24 = ssub.s32 32, 32
      %25 = vsyncadd [#allocation4], %s24
      %s27 = sshll.u32 [#allocation3], 4
      %s28 = int_to_ptr.vmem [resolvable:$true] %s27
      %30 = dma.hbm_to_vmem [thread:$0]  %s2, 32, %s28, [#allocation4]
    $region13: #{tpu_custom_call.1} parent=1 // pred_fallthru
      _
    // Predicated region
    $region14: #{tpu_custom_call.1} parent=1 // pred_check
      _
    $region15: #{tpu_custom_call.1} parent=1 // pred_check_branch
      %32 = sbr.rel (0) target = $region17
    $region16: #{tpu_custom_call.1} parent=1 // pred_region
      %s34 = ssub.s32 256, 256
      %35 = vsyncadd [#allocation6], %s34
      %s36 = sshll.u32 [#allocation5], 4
      %s37 = int_to_ptr.vmem [resolvable:$true] %s36
      %42 = dma.hbm_to_vmem [thread:$0]  %s3, 256, %s37, [#allocation6], 64, 64, 4
    $region17: #{tpu_custom_call.1} parent=1 // pred_fallthru
      _
    // Predicated region
    $region18: #{tpu_custom_call.1} parent=1 // pred_check
      _
    $region19: #{tpu_custom_call.1} parent=1 // pred_check_branch
      %44 = sbr.rel (0) target = $region21
    $region20: #{tpu_custom_call.1} parent=1 // pred_region
      %s46 = ssub.s32 16, 16
      %47 = vsyncadd [#allocation6], %s46
      %s49 = sshll.u32 [#allocation7], 4
      %s50 = int_to_ptr.vmem [resolvable:$true] %s49
      %52 = dma.hbm_to_vmem [thread:$0]  %s4, 16, %s50, [#allocation6]
    $region21: #{tpu_custom_call.1} parent=1 // pred_fallthru
      _
    // Predicated region
    $region22: #{tpu_custom_call.1} parent=1 // pred_check
      _
    $region23: #{tpu_custom_call.1} parent=1 // pred_check_branch
      %54 = sbr.rel (0) target = $region25
    $region24: #{tpu_custom_call.1} parent=1 // pred_region
      _
    $region25: #{tpu_custom_call.1} parent=1 // pred_fallthru
      _
    // Predicated region
    $region26: #{tpu_custom_call.1} parent=1 // pred_check
      _
    $region27: #{tpu_custom_call.1} parent=1 // pred_check_branch
      %56 = sbr.rel (0) target = $region29
    $region28: #{tpu_custom_call.1} parent=1 // pred_region
      %s58 = ssub.s32 64, 64
      %59 = vsyncadd [#allocation9], %s58
      %s61 = sshll.u32 [#allocation8], 4
      %s62 = int_to_ptr.vmem [resolvable:$true] %s61
      %64 = dma.hbm_to_vmem [thread:$0]  %s6, 64, %s62, [#allocation9]
    $region29: #{tpu_custom_call.1} parent=1 // pred_fallthru
      _
    // Predicated region
    $region30: #{tpu_custom_call.1} parent=1 // pred_check
      _
    $region31: #{tpu_custom_call.1} parent=1 // pred_check_branch
      %66 = sbr.rel (0) target = $region33
    $region32: #{tpu_custom_call.1} parent=1 // pred_region
      _
    $region33: #{tpu_custom_call.1} parent=1 // pred_fallthru
      _
    // Predicated region
    $region34: #{tpu_custom_call.1} parent=1 // pred_check
      _
    $region35: #{tpu_custom_call.1} parent=1 // pred_check_branch
      %68 = sbr.rel (0) target = $region37
    $region36: #{tpu_custom_call.1} parent=1 // pred_region
      _
    $region37: #{tpu_custom_call.1} parent=1 // pred_fallthru
      _
    // Predicated region
    $region38: #{tpu_custom_call.1} parent=1 // pred_check
      _
    $region39: #{tpu_custom_call.1} parent=1 // pred_check_branch
      %70 = sbr.rel (0) target = $region41
    $region40: #{tpu_custom_call.1} parent=1 // pred_region
      %71 = dma.done [#allocation4], 32
    $region41: #{tpu_custom_call.1} parent=1 // pred_fallthru
      _
    // Predicated region
    $region42: #{tpu_custom_call.1} parent=1 // pred_check
      _
    $region43: #{tpu_custom_call.1} parent=1 // pred_check_branch
      %73 = sbr.rel (0) target = $region45
    $region44: #{tpu_custom_call.1} parent=1 // pred_region
      %74 = dma.done [#allocation6], 256
    $region45: #{tpu_custom_call.1} parent=1 // pred_fallthru
      _
    // Predicated region
    $region46: #{tpu_custom_call.1} parent=1 // pred_check
      _
    $region47: #{tpu_custom_call.1} parent=1 // pred_check_branch
      %76 = sbr.rel (0) target = $region49
    $region48: #{tpu_custom_call.1} parent=1 // pred_region
      %77 = dma.done [#allocation6], 16
    $region49: #{tpu_custom_call.1} parent=1 // pred_fallthru
      _
    // Predicated region
    $region50: #{tpu_custom_call.1} parent=1 // pred_check
      _
    $region51: #{tpu_custom_call.1} parent=1 // pred_check_branch
      %79 = sbr.rel (0) target = $region53
    $region52: #{tpu_custom_call.1} parent=1 // pred_region
      %80 = dma.done [#allocation9], 64
    $region53: #{tpu_custom_call.1} parent=1 // pred_fallthru
      _
    %v82 = vld [vmem:[%s0] sm:$0xf]
    %v83 = vld [vmem:[%s0 + $0x4] sm:$0xf]
    %v84 = vld [vmem:[%s0 + $0x8] sm:$0xf]
    %v85 = vld [vmem:[%s0 + $0xc] sm:$0xf]
    %v86 = vld [vmem:[%s0 + $0x10] sm:$0xf]
    %v87 = vld [vmem:[%s0 + $0x14] sm:$0xf]
    %v88 = vld [vmem:[%s0 + $0x18] sm:$0xf]
    %v89 = vld [vmem:[%s0 + $0x1c] sm:$0xf]
    %v90 = vld [vmem:[#allocation3] sm:$0x3]
    %v91 = vld [vmem:[#allocation7] sm:$0x1]
    %v93 = vlaneseq
    %v94 = vshrl.u32 %v93, 7
    %v95 = vsub.s32 0, %v94
    %v96 = vrot.slane %v91, %v95
    %v106 = vunpack.c.l.b16 %v82
    %v107 = vunpack.c.l.b16 %v83
    %v108 = vunpack.c.l.b16 %v84
    %v109 = vunpack.c.l.b16 %v85
    %v110 = vunpack.c.l.b16 %v86
    %v111 = vunpack.c.l.b16 %v87
    %v112 = vunpack.c.l.b16 %v88
    %v113 = vunpack.c.l.b16 %v89
    %v114 = vpack.c.b16 %v107, %v106
    %v115 = vpack.c.b16 %v109, %v108
    %v116 = vpack.c.b16 %v111, %v110
    %v117 = vpack.c.b16 %v113, %v112
    %vm118 = vcmask 31744
    %v120 = vsel %vm118, %v114, 0
    %v123 = vsel %vm118, %v115, 0
    %v126 = vsel %vm118, %v116, 0
    %v129 = vsel %vm118, %v117, 0
    %vm131 = vcmask 1041408
    %v133 = vsel %vm131, %v90, 0
    %135 = vmatprep.subr.bf16.mxu0 0
    %136 = vmatpush1.bf16.msra.mxu0 %v133
    %137 = vmatprep.subr.bf16.mxu0 0
    %138 = vmatpush1.bf16.msra.mxu0 0
    %139 = vmatprep.subr.bf16.mxu0 0
    %140 = vmatpush1.bf16.msra.mxu0 0
    %141 = vmatprep.subr.bf16.mxu0 0
    %142 = vmatpush1.bf16.msra.mxu0 0
    %143 = vmatprep.subr.bf16.mxu0 0
    %144 = vmatpush1.bf16.msra.mxu0 0
    %145 = vmatprep.subr.bf16.mxu0 0
    %146 = vmatpush1.bf16.msra.mxu0 0
    %147 = vmatprep.subr.bf16.mxu0 0
    %148 = vmatpush1.bf16.msra.mxu0 0
    %149 = vmatprep.subr.bf16.mxu0 0
    %150 = vmatpush1.bf16.msra.mxu0 0
    %151 = vmatprep.subr.bf16.mxu0 0
    %152 = vmatpush1.bf16.msra.mxu0 0
    %153 = vmatprep.subr.bf16.mxu0 0
    %154 = vmatpush1.bf16.msra.mxu0 0
    %155 = vmatprep.subr.bf16.mxu0 0
    %156 = vmatpush1.bf16.msra.mxu0 0
    %157 = vmatprep.subr.bf16.mxu0 0
    %158 = vmatpush1.bf16.msra.mxu0 0
    %159 = vmatprep.subr.bf16.mxu0 0
    %160 = vmatpush1.bf16.msra.mxu0 0
    %161 = vmatprep.subr.bf16.mxu0 0
    %162 = vmatpush1.bf16.msra.mxu0 0
    %163 = vmatprep.subr.bf16.mxu0 0
    %164 = vmatpush1.bf16.msra.mxu0 0
    %165 = vmatprep.subr.bf16.mxu0 0
    %166 = vmatpush1.bf16.msra.mxu0 0
    %167 = vmatprep.mubr.bf16.mxu0 0
    %168 = vmatmul.mubr.bf16.gmra.mrb[0].mxu0 %v120
    %v169 = vpop.f32.mrb[0].mxu0
    %v170 = vadd.f32 %v96, %v169
    %v171 = vpop.f32.mrb[0].mxu0
    %v172 = vpop.f32.mrb[0].mxu0
    %v173 = vadd.f32 %v96, %v172
    %v174 = vpop.f32.mrb[0].mxu0
    %175 = vmatprep.mubr.bf16.mxu0 0
    %176 = vmatmul.mubr.bf16.gmra.mrb[0].mxu0 %v123
    %v177 = vpop.f32.mrb[0].mxu0
    %v178 = vadd.f32 %v96, %v177
    %v179 = vpop.f32.mrb[0].mxu0
    %v180 = vpop.f32.mrb[0].mxu0
    %v181 = vadd.f32 %v96, %v180
    %v182 = vpop.f32.mrb[0].mxu0
    %183 = vmatprep.mubr.bf16.mxu0 0
    %184 = vmatmul.mubr.bf16.gmra.mrb[0].mxu0 %v126
    %v185 = vpop.f32.mrb[0].mxu0
    %v186 = vadd.f32 %v96, %v185
    %v187 = vpop.f32.mrb[0].mxu0
    %v188 = vpop.f32.mrb[0].mxu0
    %v189 = vadd.f32 %v96, %v188
    %v190 = vpop.f32.mrb[0].mxu0
    %191 = vmatprep.mubr.bf16.mxu0 0
    %192 = vmatmul.mubr.bf16.gmra.mrb[0].mxu0 %v129
    %v193 = vpop.f32.mrb[0].mxu0
    %v194 = vadd.f32 %v96, %v193
    %v195 = vpop.f32.mrb[0].mxu0
    %v196 = vpop.f32.mrb[0].mxu0
    %v197 = vadd.f32 %v96, %v196
    %v198 = vpop.f32.mrb[0].mxu0
    %199 = vdwg.mxu0
    %200 = vst [vmem:[#allocation2] sm:$0xff] %v170
    %201 = vst [vmem:[#allocation2 + $0x8] sm:$0xff] %v173
    %202 = vst [vmem:[#allocation2 + $0x10] sm:$0xff] %v178
    %203 = vst [vmem:[#allocation2 + $0x18] sm:$0xff] %v181
    %204 = vst [vmem:[#allocation2 + $0x20] sm:$0xff] %v186
    %205 = vst [vmem:[#allocation2 + $0x28] sm:$0xff] %v189
    %206 = vst [vmem:[#allocation2 + $0x30] sm:$0xff] %v194
    %207 = vst [vmem:[#allocation2 + $0x38] sm:$0xff] %v197
    %v208 = vld [vmem:[#allocation5] sm:$0xf]
    %v209 = vld [vmem:[#allocation5 + $0x4] sm:$0xf]
    %v210 = vld [vmem:[#allocation5 + $0x8] sm:$0xf]
    %v211 = vld [vmem:[#allocation5 + $0xc] sm:$0xf]
    %v212 = vld [vmem:[#allocation2] sm:$0xff]
    %v217 = vunpack.c.l.b16 %v208
    %v218 = vunpack.c.l.b16 %v209
    %v219 = vunpack.c.l.b16 %v210
    %v220 = vunpack.c.l.b16 %v211
    %v221 = vpack.c.b16 %v218, %v217
    %v222 = vpack.c.b16 %v220, %v219
    %vm225 = vcmask 261120
    %v227 = vsel %vm225, 0, 0
    %229 = vmatprep.subr.bf16.mxu0 0
    %230 = vmatpush1.bf16.msra.mxu0 %v221
    %231 = vmatprep.subr.bf16.mxu0 0
    %232 = vmatpush1.bf16.msra.mxu0 %v222
    %233 = vmatprep.subr.bf16.mxu0 0
    %234 = vmatpush1.bf16.msra.mxu0 0
    %235 = vmatprep.subr.bf16.mxu0 0
    %236 = vmatpush1.bf16.msra.mxu0 0
    %237 = vmatprep.subr.bf16.mxu0 0
    %238 = vmatpush1.bf16.msra.mxu0 0
    %239 = vmatprep.subr.bf16.mxu0 0
    %240 = vmatpush1.bf16.msra.mxu0 0
    %241 = vmatprep.subr.bf16.mxu0 0
    %242 = vmatpush1.bf16.msra.mxu0 0
    %243 = vmatprep.subr.bf16.mxu0 0
    %244 = vmatpush1.bf16.msra.mxu0 0
    %245 = vmatprep.subr.bf16.mxu0 0
    %246 = vmatpush1.bf16.msra.mxu0 0
    %247 = vmatprep.subr.bf16.mxu0 0
    %248 = vmatpush1.bf16.msra.mxu0 0
    %249 = vmatprep.subr.bf16.mxu0 0
    %250 = vmatpush1.bf16.msra.mxu0 0
    %251 = vmatprep.subr.bf16.mxu0 0
    %252 = vmatpush1.bf16.msra.mxu0 0
    %253 = vmatprep.subr.bf16.mxu0 0
    %254 = vmatpush1.bf16.msra.mxu0 0
    %255 = vmatprep.subr.bf16.mxu0 0
    %256 = vmatpush1.bf16.msra.mxu0 0
    %257 = vmatprep.subr.bf16.mxu0 0
    %258 = vmatpush1.bf16.msra.mxu0 0
    %259 = vmatprep.subr.bf16.mxu0 0
    %260 = vmatpush1.bf16.msra.mxu0 0
    %261 = vmatprep.mubr.bf16.mxu0 0
    %262 = vmatmul.mubr.bf16.gmra.mrb[0].mxu0 %v227
    %v263 = vpop.f32.mrb[0].mxu0
    %v264 = vadd.f32 %v212, %v263
    %v265 = vpop.f32.mrb[0].mxu0
    %v266 = vpop.f32.mrb[0].mxu0
    %v267 = vpop.f32.mrb[0].mxu0
    %268 = vdwg.mxu0
    %v269 = vmul.f32 %v264, 0.5
    %v270 = vtanh.pop %v269
    %v271 = vmul.f32 %v270, 0.5
    %v272 = vadd.f32 %v271, 0.5
    %v273 = vtanh.pop %v264
    %v274 = vmul.f32 %v272, 0.0
    %276 = vrot.lane.b32.xlu0 %v273, 64
    %v277 = vpop.permute.xlu0 %276
    %v279 = vmul.f32 %v272, %v277
    %281 = vrot.lane.b32.xlu0 %v279, 32
    %v282 = vpop.permute.xlu0 %281
    %v284 = vadd.f32 %v274, %v282
    %v285 = vtanh.pop %v284
    %287 = vrot.lane.b32.xlu0 %v285, 64
    %v288 = vpop.permute.xlu0 %287
    %v290 = vmul.f32 %v272, %v288
    %v291 = vpack.c.bf16 %v290, %v290
    %s292 = scalar_lea.vmem [#allocation2], 8
    %v293 = vld [vmem:[%s292] sm:$0xff]
    %295 = vrot.lane.b32.xlu0 %v291, 32
    %v296 = vpop.permute.xlu0 %295
    %v298 = vsel %vm225, %v296, 0
    %300 = vmatprep.subr.bf16.mxu0 0
    %301 = vmatpush1.bf16.msra.mxu0 %v221
    %302 = vmatprep.subr.bf16.mxu0 0
    %303 = vmatpush1.bf16.msra.mxu0 %v222
    %304 = vmatprep.subr.bf16.mxu0 0
    %305 = vmatpush1.bf16.msra.mxu0 0
    %306 = vmatprep.subr.bf16.mxu0 0
    %307 = vmatpush1.bf16.msra.mxu0 0
    %308 = vmatprep.subr.bf16.mxu0 0
    %309 = vmatpush1.bf16.msra.mxu0 0
    %310 = vmatprep.subr.bf16.mxu0 0
    %311 = vmatpush1.bf16.msra.mxu0 0
    %312 = vmatprep.subr.bf16.mxu0 0
    %313 = vmatpush1.bf16.msra.mxu0 0
    %314 = vmatprep.subr.bf16.mxu0 0
    %315 = vmatpush1.bf16.msra.mxu0 0
    %316 = vmatprep.subr.bf16.mxu0 0
    %317 = vmatpush1.bf16.msra.mxu0 0
    %318 = vmatprep.subr.bf16.mxu0 0
    %319 = vmatpush1.bf16.msra.mxu0 0
    %320 = vmatprep.subr.bf16.mxu0 0
    %321 = vmatpush1.bf16.msra.mxu0 0
    %322 = vmatprep.subr.bf16.mxu0 0
    %323 = vmatpush1.bf16.msra.mxu0 0
    %324 = vmatprep.subr.bf16.mxu0 0
    %325 = vmatpush1.bf16.msra.mxu0 0
    %326 = vmatprep.subr.bf16.mxu0 0
    %327 = vmatpush1.bf16.msra.mxu0 0
    %328 = vmatprep.subr.bf16.mxu0 0
    %329 = vmatpush1.bf16.msra.mxu0 0
    %330 = vmatprep.subr.bf16.mxu0 0
    %331 = vmatpush1.bf16.msra.mxu0 0
    %332 = vmatprep.mubr.bf16.mxu0 0
    %333 = vmatmul.mubr.bf16.gmra.mrb[0].mxu0 %v298
    %v334 = vpop.f32.mrb[0].mxu0
    %v335 = vadd.f32 %v293, %v334
    %v336 = vpop.f32.mrb[0].mxu0
    %v337 = vpop.f32.mrb[0].mxu0
    %v338 = vpop.f32.mrb[0].mxu0
    %339 = vdwg.mxu0
    %v340 = vmul.f32 %v335, 0.5
    %v341 = vtanh.pop %v340
    %v342 = vmul.f32 %v341, 0.5
    %v343 = vadd.f32 %v342, 0.5
    %v344 = vtanh.pop %v335
    %v345 = vmul.f32 %v343, %v284
    %347 = vrot.lane.b32.xlu0 %v344, 64
    %v348 = vpop.permute.xlu0 %347
    %v350 = vmul.f32 %v343, %v348
    %352 = vrot.lane.b32.xlu0 %v350, 32
    %v353 = vpop.permute.xlu0 %352
    %v355 = vadd.f32 %v345, %v353
    %v356 = vtanh.pop %v355
    %358 = vrot.lane.b32.xlu0 %v356, 64
    %v359 = vpop.permute.xlu0 %358
    %v361 = vmul.f32 %v343, %v359
    %v362 = vpack.c.bf16 %v361, %v361
    %s363 = scalar_lea.vmem [#allocation2], 16
    %v364 = vld [vmem:[%s363] sm:$0xff]
    %366 = vrot.lane.b32.xlu0 %v362, 32
    %v367 = vpop.permute.xlu0 %366
    %v369 = vsel %vm225, %v367, 0
    %371 = vmatprep.subr.bf16.mxu0 0
    %372 = vmatpush1.bf16.msra.mxu0 %v221
    %373 = vmatprep.subr.bf16.mxu0 0
    %374 = vmatpush1.bf16.msra.mxu0 %v222
    %375 = vmatprep.subr.bf16.mxu0 0
    %376 = vmatpush1.bf16.msra.mxu0 0
    %377 = vmatprep.subr.bf16.mxu0 0
    %378 = vmatpush1.bf16.msra.mxu0 0
    %379 = vmatprep.subr.bf16.mxu0 0
    %380 = vmatpush1.bf16.msra.mxu0 0
    %381 = vmatprep.subr.bf16.mxu0 0
    %382 = vmatpush1.bf16.msra.mxu0 0
    %383 = vmatprep.subr.bf16.mxu0 0
    %384 = vmatpush1.bf16.msra.mxu0 0
    %385 = vmatprep.subr.bf16.mxu0 0
    %386 = vmatpush1.bf16.msra.mxu0 0
    %387 = vmatprep.subr.bf16.mxu0 0
    %388 = vmatpush1.bf16.msra.mxu0 0
    %389 = vmatprep.subr.bf16.mxu0 0
    %390 = vmatpush1.bf16.msra.mxu0 0
    %391 = vmatprep.subr.bf16.mxu0 0
    %392 = vmatpush1.bf16.msra.mxu0 0
    %393 = vmatprep.subr.bf16.mxu0 0
    %394 = vmatpush1.bf16.msra.mxu0 0
    %395 = vmatprep.subr.bf16.mxu0 0
    %396 = vmatpush1.bf16.msra.mxu0 0
    %397 = vmatprep.subr.bf16.mxu0 0
    %398 = vmatpush1.bf16.msra.mxu0 0
    %399 = vmatprep.subr.bf16.mxu0 0
    %400 = vmatpush1.bf16.msra.mxu0 0
    %401 = vmatprep.subr.bf16.mxu0 0
    %402 = vmatpush1.bf16.msra.mxu0 0
    %403 = vmatprep.mubr.bf16.mxu0 0
    %404 = vmatmul.mubr.bf16.gmra.mrb[0].mxu0 %v369
    %v405 = vpop.f32.mrb[0].mxu0
    %v406 = vadd.f32 %v364, %v405
    %v407 = vpop.f32.mrb[0].mxu0
    %v408 = vpop.f32.mrb[0].mxu0
    %v409 = vpop.f32.mrb[0].mxu0
    %410 = vdwg.mxu0
    %v411 = vmul.f32 %v406, 0.5
    %v412 = vtanh.pop %v411
    %v413 = vmul.f32 %v412, 0.5
    %v414 = vadd.f32 %v413, 0.5
    %v415 = vtanh.pop %v406
    %v416 = vmul.f32 %v414, %v355
    %418 = vrot.lane.b32.xlu0 %v415, 64
    %v419 = vpop.permute.xlu0 %418
    %v421 = vmul.f32 %v414, %v419
    %423 = vrot.lane.b32.xlu0 %v421, 32
    %v424 = vpop.permute.xlu0 %423
    %v426 = vadd.f32 %v416, %v424
    %v427 = vtanh.pop %v426
    %429 = vrot.lane.b32.xlu0 %v427, 64
    %v430 = vpop.permute.xlu0 %429
    %v432 = vmul.f32 %v414, %v430
    %v433 = vpack.c.bf16 %v432, %v432
    %s434 = scalar_lea.vmem [#allocation2], 24
    %v435 = vld [vmem:[%s434] sm:$0xff]
    %437 = vrot.lane.b32.xlu0 %v433, 32
    %v438 = vpop.permute.xlu0 %437
    %v440 = vsel %vm225, %v438, 0
    %442 = vmatprep.subr.bf16.mxu0 0
    %443 = vmatpush1.bf16.msra.mxu0 %v221
    %444 = vmatprep.subr.bf16.mxu0 0
    %445 = vmatpush1.bf16.msra.mxu0 %v222
    %446 = vmatprep.subr.bf16.mxu0 0
    %447 = vmatpush1.bf16.msra.mxu0 0
    %448 = vmatprep.subr.bf16.mxu0 0
    %449 = vmatpush1.bf16.msra.mxu0 0
    %450 = vmatprep.subr.bf16.mxu0 0
    %451 = vmatpush1.bf16.msra.mxu0 0
    %452 = vmatprep.subr.bf16.mxu0 0
    %453 = vmatpush1.bf16.msra.mxu0 0
    %454 = vmatprep.subr.bf16.mxu0 0
    %455 = vmatpush1.bf16.msra.mxu0 0
    %456 = vmatprep.subr.bf16.mxu0 0
    %457 = vmatpush1.bf16.msra.mxu0 0
    %458 = vmatprep.subr.bf16.mxu0 0
    %459 = vmatpush1.bf16.msra.mxu0 0
    %460 = vmatprep.subr.bf16.mxu0 0
    %461 = vmatpush1.bf16.msra.mxu0 0
    %462 = vmatprep.subr.bf16.mxu0 0
    %463 = vmatpush1.bf16.msra.mxu0 0
    %464 = vmatprep.subr.bf16.mxu0 0
    %465 = vmatpush1.bf16.msra.mxu0 0
    %466 = vmatprep.subr.bf16.mxu0 0
    %467 = vmatpush1.bf16.msra.mxu0 0
    %468 = vmatprep.subr.bf16.mxu0 0
    %469 = vmatpush1.bf16.msra.mxu0 0
    %470 = vmatprep.subr.bf16.mxu0 0
    %471 = vmatpush1.bf16.msra.mxu0 0
    %472 = vmatprep.subr.bf16.mxu0 0
    %473 = vmatpush1.bf16.msra.mxu0 0
    %474 = vmatprep.mubr.bf16.mxu0 0
    %475 = vmatmul.mubr.bf16.gmra.mrb[0].mxu0 %v440
    %v476 = vpop.f32.mrb[0].mxu0
    %v477 = vadd.f32 %v435, %v476
    %v478 = vpop.f32.mrb[0].mxu0
    %v479 = vpop.f32.mrb[0].mxu0
    %v480 = vpop.f32.mrb[0].mxu0
    %481 = vdwg.mxu0
    %v482 = vmul.f32 %v477, 0.5
    %v483 = vtanh.pop %v482
    %v484 = vmul.f32 %v483, 0.5
    %v485 = vadd.f32 %v484, 0.5
    %v486 = vtanh.pop %v477
    %v487 = vmul.f32 %v485, %v426
    %489 = vrot.lane.b32.xlu0 %v486, 64
    %v490 = vpop.permute.xlu0 %489
    %v492 = vmul.f32 %v485, %v490
    %494 = vrot.lane.b32.xlu0 %v492, 32
    %v495 = vpop.permute.xlu0 %494
    %v497 = vadd.f32 %v487, %v495
    %v498 = vtanh.pop %v497
    %500 = vrot.lane.b32.xlu0 %v498, 64
    %v501 = vpop.permute.xlu0 %500
    %v503 = vmul.f32 %v485, %v501
    %v504 = vpack.c.bf16 %v503, %v503
    %s505 = scalar_lea.vmem [#allocation2], 32
    %v506 = vld [vmem:[%s505] sm:$0xff]
    %508 = vrot.lane.b32.xlu0 %v504, 32
    %v509 = vpop.permute.xlu0 %508
    %v511 = vsel %vm225, %v509, 0
    %513 = vmatprep.subr.bf16.mxu0 0
    %514 = vmatpush1.bf16.msra.mxu0 %v221
    %515 = vmatprep.subr.bf16.mxu0 0
    %516 = vmatpush1.bf16.msra.mxu0 %v222
    %517 = vmatprep.subr.bf16.mxu0 0
    %518 = vmatpush1.bf16.msra.mxu0 0
    %519 = vmatprep.subr.bf16.mxu0 0
    %520 = vmatpush1.bf16.msra.mxu0 0
    %521 = vmatprep.subr.bf16.mxu0 0
    %522 = vmatpush1.bf16.msra.mxu0 0
    %523 = vmatprep.subr.bf16.mxu0 0
    %524 = vmatpush1.bf16.msra.mxu0 0
    %525 = vmatprep.subr.bf16.mxu0 0
    %526 = vmatpush1.bf16.msra.mxu0 0
    %527 = vmatprep.subr.bf16.mxu0 0
    %528 = vmatpush1.bf16.msra.mxu0 0
    %529 = vmatprep.subr.bf16.mxu0 0
    %530 = vmatpush1.bf16.msra.mxu0 0
    %531 = vmatprep.subr.bf16.mxu0 0
    %532 = vmatpush1.bf16.msra.mxu0 0
    %533 = vmatprep.subr.bf16.mxu0 0
    %534 = vmatpush1.bf16.msra.mxu0 0
    %535 = vmatprep.subr.bf16.mxu0 0
    %536 = vmatpush1.bf16.msra.mxu0 0
    %537 = vmatprep.subr.bf16.mxu0 0
    %538 = vmatpush1.bf16.msra.mxu0 0
    %539 = vmatprep.subr.bf16.mxu0 0
    %540 = vmatpush1.bf16.msra.mxu0 0
    %541 = vmatprep.subr.bf16.mxu0 0
    %542 = vmatpush1.bf16.msra.mxu0 0
    %543 = vmatprep.subr.bf16.mxu0 0
    %544 = vmatpush1.bf16.msra.mxu0 0
    %545 = vmatprep.mubr.bf16.mxu0 0
    %546 = vmatmul.mubr.bf16.gmra.mrb[0].mxu0 %v511
    %v547 = vpop.f32.mrb[0].mxu0
    %v548 = vadd.f32 %v506, %v547
    %v549 = vpop.f32.mrb[0].mxu0
    %v550 = vpop.f32.mrb[0].mxu0
    %v551 = vpop.f32.mrb[0].mxu0
    %552 = vdwg.mxu0
    %v553 = vmul.f32 %v548, 0.5
    %v554 = vtanh.pop %v553
    %v555 = vmul.f32 %v554, 0.5
    %v556 = vadd.f32 %v555, 0.5
    %v557 = vtanh.pop %v548
    %v558 = vmul.f32 %v556, %v497
    %560 = vrot.lane.b32.xlu0 %v557, 64
    %v561 = vpop.permute.xlu0 %560
    %v563 = vmul.f32 %v556, %v561
    %565 = vrot.lane.b32.xlu0 %v563, 32
    %v566 = vpop.permute.xlu0 %565
    %v568 = vadd.f32 %v558, %v566
    %v569 = vtanh.pop %v568
    %571 = vrot.lane.b32.xlu0 %v569, 64
    %v572 = vpop.permute.xlu0 %571
    %v574 = vmul.f32 %v556, %v572
    %v575 = vpack.c.bf16 %v574, %v574
    %s576 = scalar_lea.vmem [#allocation2], 40
    %v577 = vld [vmem:[%s576] sm:$0xff]
    %579 = vrot.lane.b32.xlu0 %v575, 32
    %v580 = vpop.permute.xlu0 %579
    %v582 = vsel %vm225, %v580, 0
    %584 = vmatprep.subr.bf16.mxu0 0
    %585 = vmatpush1.bf16.msra.mxu0 %v221
    %586 = vmatprep.subr.bf16.mxu0 0
    %587 = vmatpush1.bf16.msra.mxu0 %v222
    %588 = vmatprep.subr.bf16.mxu0 0
    %589 = vmatpush1.bf16.msra.mxu0 0
    %590 = vmatprep.subr.bf16.mxu0 0
    %591 = vmatpush1.bf16.msra.mxu0 0
    %592 = vmatprep.subr.bf16.mxu0 0
    %593 = vmatpush1.bf16.msra.mxu0 0
    %594 = vmatprep.subr.bf16.mxu0 0
    %595 = vmatpush1.bf16.msra.mxu0 0
    %596 = vmatprep.subr.bf16.mxu0 0
    %597 = vmatpush1.bf16.msra.mxu0 0
    %598 = vmatprep.subr.bf16.mxu0 0
    %599 = vmatpush1.bf16.msra.mxu0 0
    %600 = vmatprep.subr.bf16.mxu0 0
    %601 = vmatpush1.bf16.msra.mxu0 0
    %602 = vmatprep.subr.bf16.mxu0 0
    %603 = vmatpush1.bf16.msra.mxu0 0
    %604 = vmatprep.subr.bf16.mxu0 0
    %605 = vmatpush1.bf16.msra.mxu0 0
    %606 = vmatprep.subr.bf16.mxu0 0
    %607 = vmatpush1.bf16.msra.mxu0 0
    %608 = vmatprep.subr.bf16.mxu0 0
    %609 = vmatpush1.bf16.msra.mxu0 0
    %610 = vmatprep.subr.bf16.mxu0 0
    %611 = vmatpush1.bf16.msra.mxu0 0
    %612 = vmatprep.subr.bf16.mxu0 0
    %613 = vmatpush1.bf16.msra.mxu0 0
    %614 = vmatprep.subr.bf16.mxu0 0
    %615 = vmatpush1.bf16.msra.mxu0 0
    %616 = vmatprep.mubr.bf16.mxu0 0
    %617 = vmatmul.mubr.bf16.gmra.mrb[0].mxu0 %v582
    %v618 = vpop.f32.mrb[0].mxu0
    %v619 = vadd.f32 %v577, %v618
    %v620 = vpop.f32.mrb[0].mxu0
    %v621 = vpop.f32.mrb[0].mxu0
    %v622 = vpop.f32.mrb[0].mxu0
    %623 = vdwg.mxu0
    %v624 = vmul.f32 %v619, 0.5
    %v625 = vtanh.pop %v624
    %v626 = vmul.f32 %v625, 0.5
    %v627 = vadd.f32 %v626, 0.5
    %v628 = vtanh.pop %v619
    %v629 = vmul.f32 %v627, %v568
    %631 = vrot.lane.b32.xlu0 %v628, 64
    %v632 = vpop.permute.xlu0 %631
    %v634 = vmul.f32 %v627, %v632
    %636 = vrot.lane.b32.xlu0 %v634, 32
    %v637 = vpop.permute.xlu0 %636
    %v639 = vadd.f32 %v629, %v637
    %v640 = vtanh.pop %v639
    %642 = vrot.lane.b32.xlu0 %v640, 64
    %v643 = vpop.permute.xlu0 %642
    %v645 = vmul.f32 %v627, %v643
    %v646 = vpack.c.bf16 %v645, %v645
    %s647 = scalar_lea.vmem [#allocation2], 48
    %v648 = vld [vmem:[%s647] sm:$0xff]
    %650 = vrot.lane.b32.xlu0 %v646, 32
    %v651 = vpop.permute.xlu0 %650
    %v653 = vsel %vm225, %v651, 0
    %655 = vmatprep.subr.bf16.mxu0 0
    %656 = vmatpush1.bf16.msra.mxu0 %v221
    %657 = vmatprep.subr.bf16.mxu0 0
    %658 = vmatpush1.bf16.msra.mxu0 %v222
    %659 = vmatprep.subr.bf16.mxu0 0
    %660 = vmatpush1.bf16.msra.mxu0 0
    %661 = vmatprep.subr.bf16.mxu0 0
    %662 = vmatpush1.bf16.msra.mxu0 0
    %663 = vmatprep.subr.bf16.mxu0 0
    %664 = vmatpush1.bf16.msra.mxu0 0
    %665 = vmatprep.subr.bf16.mxu0 0
    %666 = vmatpush1.bf16.msra.mxu0 0
    %667 = vmatprep.subr.bf16.mxu0 0
    %668 = vmatpush1.bf16.msra.mxu0 0
    %669 = vmatprep.subr.bf16.mxu0 0
    %670 = vmatpush1.bf16.msra.mxu0 0
    %671 = vmatprep.subr.bf16.mxu0 0
    %672 = vmatpush1.bf16.msra.mxu0 0
    %673 = vmatprep.subr.bf16.mxu0 0
    %674 = vmatpush1.bf16.msra.mxu0 0
    %675 = vmatprep.subr.bf16.mxu0 0
    %676 = vmatpush1.bf16.msra.mxu0 0
    %677 = vmatprep.subr.bf16.mxu0 0
    %678 = vmatpush1.bf16.msra.mxu0 0
    %679 = vmatprep.subr.bf16.mxu0 0
    %680 = vmatpush1.bf16.msra.mxu0 0
    %681 = vmatprep.subr.bf16.mxu0 0
    %682 = vmatpush1.bf16.msra.mxu0 0
    %683 = vmatprep.subr.bf16.mxu0 0
    %684 = vmatpush1.bf16.msra.mxu0 0
    %685 = vmatprep.subr.bf16.mxu0 0
    %686 = vmatpush1.bf16.msra.mxu0 0
    %687 = vmatprep.mubr.bf16.mxu0 0
    %688 = vmatmul.mubr.bf16.gmra.mrb[0].mxu0 %v653
    %v689 = vpop.f32.mrb[0].mxu0
    %v690 = vadd.f32 %v648, %v689
    %v691 = vpop.f32.mrb[0].mxu0
    %v692 = vpop.f32.mrb[0].mxu0
    %v693 = vpop.f32.mrb[0].mxu0
    %694 = vdwg.mxu0
    %v695 = vmul.f32 %v690, 0.5
    %v696 = vtanh.pop %v695
    %v697 = vmul.f32 %v696, 0.5
    %v698 = vadd.f32 %v697, 0.5
    %v699 = vtanh.pop %v690
    %v700 = vmul.f32 %v698, %v639
    %702 = vrot.lane.b32.xlu0 %v699, 64
    %v703 = vpop.permute.xlu0 %702
    %v705 = vmul.f32 %v698, %v703
    %707 = vrot.lane.b32.xlu0 %v705, 32
    %v708 = vpop.permute.xlu0 %707
    %v710 = vadd.f32 %v700, %v708
    %v711 = vtanh.pop %v710
    %713 = vrot.lane.b32.xlu0 %v711, 64
    %v714 = vpop.permute.xlu0 %713
    %v716 = vmul.f32 %v698, %v714
    %v717 = vpack.c.bf16 %v716, %v716
    %s718 = scalar_lea.vmem [#allocation2], 56
    %v719 = vld [vmem:[%s718] sm:$0xff]
    %721 = vrot.lane.b32.xlu0 %v717, 32
    %v722 = vpop.permute.xlu0 %721
    %v724 = vsel %vm225, %v722, 0
    %726 = vmatprep.subr.bf16.mxu0 0
    %727 = vmatpush1.bf16.msra.mxu0 %v221
    %728 = vmatprep.subr.bf16.mxu0 0
    %729 = vmatpush1.bf16.msra.mxu0 %v222
    %730 = vmatprep.subr.bf16.mxu0 0
    %731 = vmatpush1.bf16.msra.mxu0 0
    %732 = vmatprep.subr.bf16.mxu0 0
    %733 = vmatpush1.bf16.msra.mxu0 0
    %734 = vmatprep.subr.bf16.mxu0 0
    %735 = vmatpush1.bf16.msra.mxu0 0
    %736 = vmatprep.subr.bf16.mxu0 0
    %737 = vmatpush1.bf16.msra.mxu0 0
    %738 = vmatprep.subr.bf16.mxu0 0
    %739 = vmatpush1.bf16.msra.mxu0 0
    %740 = vmatprep.subr.bf16.mxu0 0
    %741 = vmatpush1.bf16.msra.mxu0 0
    %742 = vmatprep.subr.bf16.mxu0 0
    %743 = vmatpush1.bf16.msra.mxu0 0
    %744 = vmatprep.subr.bf16.mxu0 0
    %745 = vmatpush1.bf16.msra.mxu0 0
    %746 = vmatprep.subr.bf16.mxu0 0
    %747 = vmatpush1.bf16.msra.mxu0 0
    %748 = vmatprep.subr.bf16.mxu0 0
    %749 = vmatpush1.bf16.msra.mxu0 0
    %750 = vmatprep.subr.bf16.mxu0 0
    %751 = vmatpush1.bf16.msra.mxu0 0
    %752 = vmatprep.subr.bf16.mxu0 0
    %753 = vmatpush1.bf16.msra.mxu0 0
    %754 = vmatprep.subr.bf16.mxu0 0
    %755 = vmatpush1.bf16.msra.mxu0 0
    %756 = vmatprep.subr.bf16.mxu0 0
    %757 = vmatpush1.bf16.msra.mxu0 0
    %758 = vmatprep.mubr.bf16.mxu0 0
    %759 = vmatmul.mubr.bf16.gmra.mrb[0].mxu0 %v724
    %v760 = vpop.f32.mrb[0].mxu0
    %v761 = vadd.f32 %v719, %v760
    %v762 = vpop.f32.mrb[0].mxu0
    %v763 = vpop.f32.mrb[0].mxu0
    %v764 = vpop.f32.mrb[0].mxu0
    %765 = vdwg.mxu0
    %v766 = vmul.f32 %v761, 0.5
    %v767 = vtanh.pop %v766
    %v768 = vmul.f32 %v767, 0.5
    %v769 = vadd.f32 %v768, 0.5
    %v770 = vtanh.pop %v761
    %v771 = vmul.f32 %v769, %v710
    %773 = vrot.lane.b32.xlu0 %v770, 64
    %v774 = vpop.permute.xlu0 %773
    %v776 = vmul.f32 %v769, %v774
    %778 = vrot.lane.b32.xlu0 %v776, 32
    %v779 = vpop.permute.xlu0 %778
    %v781 = vadd.f32 %v771, %v779
    %v782 = vtanh.pop %v781
    %784 = vrot.lane.b32.xlu0 %v782, 64
    %v785 = vpop.permute.xlu0 %784
    %v787 = vmul.f32 %v769, %v785
    %v788 = vld [vmem:[%s8] sm:$0xff]
    %v789 = vld [vmem:[%s5] sm:$0xff]
    %v790 = vld [vmem:[%s5 + $0x8] sm:$0xff]
    %v791 = vld [vmem:[%s5 + $0x10] sm:$0xff]
    %v792 = vld [vmem:[%s5 + $0x18] sm:$0xff]
    %v793 = vld [vmem:[%s1] sm:$0xff]
    %v794 = vld [vmem:[#allocation8] sm:$0xf]
    %v796 = vsel %vm118, %v793, 0
    %vm798 = vcmask 1043456
    %v800 = vsel %vm798, %v794, 0
    %802 = vmatprep.subr.mxu0 0.0
    %803 = vmatpush1.msra.mxu0 %v800
    %804 = vmatprep.subr.mxu0 0.0
    %805 = vmatpush1.msra.mxu0 0.0
    %806 = vmatprep.subr.mxu0 0.0
    %807 = vmatpush1.msra.mxu0 0.0
    %808 = vmatprep.subr.mxu0 0.0
    %809 = vmatpush1.msra.mxu0 0.0
    %810 = vmatprep.subr.mxu0 0.0
    %811 = vmatpush1.msra.mxu0 0.0
    %812 = vmatprep.subr.mxu0 0.0
    %813 = vmatpush1.msra.mxu0 0.0
    %814 = vmatprep.subr.mxu0 0.0
    %815 = vmatpush1.msra.mxu0 0.0
    %816 = vmatprep.subr.mxu0 0.0
    %817 = vmatpush1.msra.mxu0 0.0
    %818 = vmatprep.subr.mxu0 0.0
    %819 = vmatpush1.msra.mxu0 0.0
    %820 = vmatprep.subr.mxu0 0.0
    %821 = vmatpush1.msra.mxu0 0.0
    %822 = vmatprep.subr.mxu0 0.0
    %823 = vmatpush1.msra.mxu0 0.0
    %824 = vmatprep.subr.mxu0 0.0
    %825 = vmatpush1.msra.mxu0 0.0
    %826 = vmatprep.subr.mxu0 0.0
    %827 = vmatpush1.msra.mxu0 0.0
    %828 = vmatprep.subr.mxu0 0.0
    %829 = vmatpush1.msra.mxu0 0.0
    %830 = vmatprep.subr.mxu0 0.0
    %831 = vmatpush1.msra.mxu0 0.0
    %832 = vmatprep.subr.mxu0 0.0
    %833 = vmatpush1.msra.mxu0 0.0
    %834 = vmatprep.subr.mxu0 0.0
    %835 = vmatpush1.msra.mxu0 0.0
    %836 = vmatprep.subr.mxu0 0.0
    %837 = vmatpush1.msra.mxu0 0.0
    %838 = vmatprep.subr.mxu0 0.0
    %839 = vmatpush1.msra.mxu0 0.0
    %840 = vmatprep.subr.mxu0 0.0
    %841 = vmatpush1.msra.mxu0 0.0
    %842 = vmatprep.subr.mxu0 0.0
    %843 = vmatpush1.msra.mxu0 0.0
    %844 = vmatprep.subr.mxu0 0.0
    %845 = vmatpush1.msra.mxu0 0.0
    %846 = vmatprep.subr.mxu0 0.0
    %847 = vmatpush1.msra.mxu0 0.0
    %848 = vmatprep.subr.mxu0 0.0
    %849 = vmatpush1.msra.mxu0 0.0
    %850 = vmatprep.subr.mxu0 0.0
    %851 = vmatpush1.msra.mxu0 0.0
    %852 = vmatprep.subr.mxu0 0.0
    %853 = vmatpush1.msra.mxu0 0.0
    %854 = vmatprep.subr.mxu0 0.0
    %855 = vmatpush1.msra.mxu0 0.0
    %856 = vmatprep.subr.mxu0 0.0
    %857 = vmatpush1.msra.mxu0 0.0
    %858 = vmatprep.subr.mxu0 0.0
    %859 = vmatpush1.msra.mxu0 0.0
    %860 = vmatprep.subr.mxu0 0.0
    %861 = vmatpush1.msra.mxu0 0.0
    %862 = vmatprep.subr.mxu0 0.0
    %863 = vmatpush1.msra.mxu0 0.0
    %864 = vmatprep.subr.mxu0 0.0
    %865 = vmatpush1.msra.mxu0 0.0
    %866 = vmatprep.mubr.f32.mxu0 0.0
    %867 = vmatmul.mubr.f32.gmra.mrb[0].mxu0 %v796
    %v868 = vpop.f32.mrb[0].mxu0
    %v869 = vadd.f32 0.0, %v868
    %v870 = vpop.f32.mrb[0].mxu0
    %871 = vdwg.mxu0
    %873 = vrot.lane.b32.xlu0 %v787, 32
    %v874 = vpop.permute.xlu0 %873
    %v875 = vsel %vm225, %v874, 0
    %877 = vmatprep.subr.mxu0 0.0
    %878 = vmatpush1.msra.mxu0 %v789
    %879 = vmatprep.subr.mxu0 0.0
    %880 = vmatpush1.msra.mxu0 %v790
    %881 = vmatprep.subr.mxu0 0.0
    %882 = vmatpush1.msra.mxu0 %v791
    %883 = vmatprep.subr.mxu0 0.0
    %884 = vmatpush1.msra.mxu0 %v792
    %885 = vmatprep.subr.mxu0 0.0
    %886 = vmatpush1.msra.mxu0 0.0
    %887 = vmatprep.subr.mxu0 0.0
    %888 = vmatpush1.msra.mxu0 0.0
    %889 = vmatprep.subr.mxu0 0.0
    %890 = vmatpush1.msra.mxu0 0.0
    %891 = vmatprep.subr.mxu0 0.0
    %892 = vmatpush1.msra.mxu0 0.0
    %893 = vmatprep.subr.mxu0 0.0
    %894 = vmatpush1.msra.mxu0 0.0
    %895 = vmatprep.subr.mxu0 0.0
    %896 = vmatpush1.msra.mxu0 0.0
    %897 = vmatprep.subr.mxu0 0.0
    %898 = vmatpush1.msra.mxu0 0.0
    %899 = vmatprep.subr.mxu0 0.0
    %900 = vmatpush1.msra.mxu0 0.0
    %901 = vmatprep.subr.mxu0 0.0
    %902 = vmatpush1.msra.mxu0 0.0
    %903 = vmatprep.subr.mxu0 0.0
    %904 = vmatpush1.msra.mxu0 0.0
    %905 = vmatprep.subr.mxu0 0.0
    %906 = vmatpush1.msra.mxu0 0.0
    %907 = vmatprep.subr.mxu0 0.0
    %908 = vmatpush1.msra.mxu0 0.0
    %909 = vmatprep.subr.mxu0 0.0
    %910 = vmatpush1.msra.mxu0 0.0
    %911 = vmatprep.subr.mxu0 0.0
    %912 = vmatpush1.msra.mxu0 0.0
    %913 = vmatprep.subr.mxu0 0.0
    %914 = vmatpush1.msra.mxu0 0.0
    %915 = vmatprep.subr.mxu0 0.0
    %916 = vmatpush1.msra.mxu0 0.0
    %917 = vmatprep.subr.mxu0 0.0
    %918 = vmatpush1.msra.mxu0 0.0
    %919 = vmatprep.subr.mxu0 0.0
    %920 = vmatpush1.msra.mxu0 0.0
    %921 = vmatprep.subr.mxu0 0.0
    %922 = vmatpush1.msra.mxu0 0.0
    %923 = vmatprep.subr.mxu0 0.0
    %924 = vmatpush1.msra.mxu0 0.0
    %925 = vmatprep.subr.mxu0 0.0
    %926 = vmatpush1.msra.mxu0 0.0
    %927 = vmatprep.subr.mxu0 0.0
    %928 = vmatpush1.msra.mxu0 0.0
    %929 = vmatprep.subr.mxu0 0.0
    %930 = vmatpush1.msra.mxu0 0.0
    %931 = vmatprep.subr.mxu0 0.0
    %932 = vmatpush1.msra.mxu0 0.0
    %933 = vmatprep.subr.mxu0 0.0
    %934 = vmatpush1.msra.mxu0 0.0
    %935 = vmatprep.subr.mxu0 0.0
    %936 = vmatpush1.msra.mxu0 0.0
    %937 = vmatprep.subr.mxu0 0.0
    %938 = vmatpush1.msra.mxu0 0.0
    %939 = vmatprep.subr.mxu0 0.0
    %940 = vmatpush1.msra.mxu0 0.0
    %941 = vmatprep.mubr.f32.mxu0 0.0
    %942 = vmatmul.mubr.f32.gmra.mrb[0].mxu0 %v875
    %v943 = vpop.f32.mrb[0].mxu0
    %v944 = vadd.f32 %v869, %v943
    %v945 = vpop.f32.mrb[0].mxu0
    %946 = vdwg.mxu0
    %v947 = vlaneseq
    %v948 = vshrl.u32 %v947, 7
    %v949 = vsub.s32 0, %v948
    %v950 = vrot.slane %v788, %v949
    %v951 = vadd.f32 %v944, %v950
    %v952 = vsel %vm225, %v951, 0.0
    %953 = vadd.xlane.f32.xlu0 %v952
    %v954 = vpop.xlane.xlu0 %953
    %v955 = vrcp.pop 32.0
    %v956 = vmul.f32 %v954, %v955
    %v957 = vsub.f32 %v951, %v956
    %v958 = vmul.f32 %v957, %v957
    %v959 = vsel %vm225, %v958, 0.0
    %960 = vadd.xlane.f32.xlu0 %v959
    %v961 = vpop.xlane.xlu0 %960
    %v962 = vmul.f32 %v961, %v955
    %v963 = vadd.f32 %v962, 1e-05
    %v964 = vrsqrt.pop %v963
    %v965 = vmul.f32 %v957, %v964
    %v966 = vlaneseq
    %v967 = vshrl.u32 %v966, 7
    %v968 = vsub.s32 1, %v967
    %v969 = vrot.slane %v788, %v968
    %v970 = vmul.f32 %v965, %v969
    %v971 = vlaneseq
    %v972 = vshrl.u32 %v971, 7
    %v973 = vsub.s32 2, %v972
    %v974 = vrot.slane %v788, %v973
    %v975 = vadd.f32 %v970, %v974
    %v976 = vmax.f32 %v975, 0.0
    %v977 = vld [vmem:[%s7] sm:$0xff]
    %v978 = vld [vmem:[%s7 + $0x8] sm:$0xff]
    %v979 = vld [vmem:[%s7 + $0x10] sm:$0xff]
    %v980 = vld [vmem:[%s7 + $0x18] sm:$0xff]
    %v981 = vlaneseq
    %v982 = vshrl.u32 %v981, 7
    %v983 = vsub.s32 3, %v982
    %v984 = vrot.slane %v788, %v983
    %v986 = vsel %vm225, %v976, 0
    %988 = vmatprep.subr.mxu0 0.0
    %989 = vmatpush1.msra.mxu0 %v977
    %990 = vmatprep.subr.mxu0 0.0
    %991 = vmatpush1.msra.mxu0 %v978
    %992 = vmatprep.subr.mxu0 0.0
    %993 = vmatpush1.msra.mxu0 %v979
    %994 = vmatprep.subr.mxu0 0.0
    %995 = vmatpush1.msra.mxu0 %v980
    %996 = vmatprep.subr.mxu0 0.0
    %997 = vmatpush1.msra.mxu0 0.0
    %998 = vmatprep.subr.mxu0 0.0
    %999 = vmatpush1.msra.mxu0 0.0
    %1000 = vmatprep.subr.mxu0 0.0
    %1001 = vmatpush1.msra.mxu0 0.0
    %1002 = vmatprep.subr.mxu0 0.0
    %1003 = vmatpush1.msra.mxu0 0.0
    %1004 = vmatprep.subr.mxu0 0.0
    %1005 = vmatpush1.msra.mxu0 0.0
    %1006 = vmatprep.subr.mxu0 0.0
    %1007 = vmatpush1.msra.mxu0 0.0
    %1008 = vmatprep.subr.mxu0 0.0
    %1009 = vmatpush1.msra.mxu0 0.0
    %1010 = vmatprep.subr.mxu0 0.0
    %1011 = vmatpush1.msra.mxu0 0.0
    %1012 = vmatprep.subr.mxu0 0.0
    %1013 = vmatpush1.msra.mxu0 0.0
    %1014 = vmatprep.subr.mxu0 0.0
    %1015 = vmatpush1.msra.mxu0 0.0
    %1016 = vmatprep.subr.mxu0 0.0
    %1017 = vmatpush1.msra.mxu0 0.0
    %1018 = vmatprep.subr.mxu0 0.0
    %1019 = vmatpush1.msra.mxu0 0.0
    %1020 = vmatprep.subr.mxu0 0.0
    %1021 = vmatpush1.msra.mxu0 0.0
    %1022 = vmatprep.subr.mxu0 0.0
    %1023 = vmatpush1.msra.mxu0 0.0
    %1024 = vmatprep.subr.mxu0 0.0
    %1025 = vmatpush1.msra.mxu0 0.0
    %1026 = vmatprep.subr.mxu0 0.0
    %1027 = vmatpush1.msra.mxu0 0.0
    %1028 = vmatprep.subr.mxu0 0.0
    %1029 = vmatpush1.msra.mxu0 0.0
    %1030 = vmatprep.subr.mxu0 0.0
    %1031 = vmatpush1.msra.mxu0 0.0
    %1032 = vmatprep.subr.mxu0 0.0
    %1033 = vmatpush1.msra.mxu0 0.0
    %1034 = vmatprep.subr.mxu0 0.0
    %1035 = vmatpush1.msra.mxu0 0.0
    %1036 = vmatprep.subr.mxu0 0.0
    %1037 = vmatpush1.msra.mxu0 0.0
    %1038 = vmatprep.subr.mxu0 0.0
    %1039 = vmatpush1.msra.mxu0 0.0
    %1040 = vmatprep.subr.mxu0 0.0
    %1041 = vmatpush1.msra.mxu0 0.0
    %1042 = vmatprep.subr.mxu0 0.0
    %1043 = vmatpush1.msra.mxu0 0.0
    %1044 = vmatprep.subr.mxu0 0.0
    %1045 = vmatpush1.msra.mxu0 0.0
    %1046 = vmatprep.subr.mxu0 0.0
    %1047 = vmatpush1.msra.mxu0 0.0
    %1048 = vmatprep.subr.mxu0 0.0
    %1049 = vmatpush1.msra.mxu0 0.0
    %1050 = vmatprep.subr.mxu0 0.0
    %1051 = vmatpush1.msra.mxu0 0.0
    %1052 = vmatprep.mubr.f32.mxu0 0.0
    %1053 = vmatmul.mubr.f32.gmra.mrb[0].mxu0 %v986
    %v1054 = vpop.f32.mrb[0].mxu0
    %v1055 = vadd.f32 %v984, %v1054
    %v1056 = vpop.f32.mrb[0].mxu0
    %1057 = vdwg.mxu0
    %v1058 = vsel %vm225, %v1055, 0.0
    %1059 = vadd.xlane.f32.xlu0 %v1058
    %v1060 = vpop.xlane.xlu0 %1059
    %v1061 = vmul.f32 %v1060, %v955
    %v1062 = vsub.f32 %v1055, %v1061
    %v1063 = vmul.f32 %v1062, %v1062
    %v1064 = vsel %vm225, %v1063, 0.0
    %1065 = vadd.xlane.f32.xlu0 %v1064
    %v1066 = vpop.xlane.xlu0 %1065
    %v1067 = vmul.f32 %v1066, %v955
    %v1068 = vadd.f32 %v1067, 1e-05
    %v1069 = vrsqrt.pop %v1068
    %v1070 = vmul.f32 %v1062, %v1069
    %v1071 = vlaneseq
    %v1072 = vshrl.u32 %v1071, 7
    %v1073 = vsub.s32 4, %v1072
    %v1074 = vrot.slane %v788, %v1073
    %v1075 = vmul.f32 %v1070, %v1074
    %v1076 = vlaneseq
    %v1077 = vshrl.u32 %v1076, 7
    %v1078 = vsub.s32 5, %v1077
    %v1079 = vrot.slane %v788, %v1078
    %v1080 = vadd.f32 %v1075, %v1079
    %v1081 = vmax.f32 %v1080, 0.0
    %v1082 = vlaneseq
    %v1083 = vshrl.u32 %v1082, 7
    %v1084 = vsub.s32 6, %v1083
    %v1085 = vrot.slane %v788, %v1084
    %v1086 = vmul.f32 %v1081, %v1085
    %v1087 = vsel %vm225, %v1086, 0.0
    %1088 = vadd.xlane.f32.xlu0 %v1087
    %v1089 = vpop.xlane.xlu0 %1088
    %v1090 = vlaneseq
    %v1091 = vshrl.u32 %v1090, 7
    %v1092 = vsub.s32 7, %v1091
    %v1093 = vrot.slane %v788, %v1092
    %v1094 = vadd.f32 %v1089, %v1093
    %vm1095 = vcmask 7168
    %1096 = vst.msk [vmem:[%s9] sm:$0xff] %vm1095, %v1094
    // Predicated region
    $region54: #{tpu_custom_call.1} parent=1 // pred_check
      _
    $region55: #{tpu_custom_call.1} parent=1 // pred_check_branch
      %1098 = sbr.rel (0) target = $region57
    $region56: #{tpu_custom_call.1} parent=1 // pred_region
      _
    $region57: #{tpu_custom_call.1} parent=1 // pred_fallthru
      _
    // Predicated region
    $region58: #{tpu_custom_call.1} parent=1 // pred_check
      _
    $region59: #{tpu_custom_call.1} parent=1 // pred_check_branch
      %1100 = sbr.rel (0) target = $region61
    $region60: #{tpu_custom_call.1} parent=1 // pred_region
      _
    $region61: #{tpu_custom_call.1} parent=1 // pred_fallthru
      _
    %1101 = vsyncpa [#allocation4], 1
    %1102 = vsyncpa [#allocation6], 1
    %1103 = vsyncpa [#allocation9], 1

</llo_original>
